<compile_context>
chip_gen: v5e
topology: v5e:2x2
jax: 0.10.0
libtpu: 0.0.40
codegen_flags: <defaults>
</compile_context>

<pallas_src>
import math
import functools

import jax
import jax.numpy as jnp
from jax.experimental import pallas as pl
from jax.experimental.pallas import tpu as pltpu


# operand dtype fed to the MXU (accumulation stays f32 via preferred_element_type)
MXU_DTYPE = jnp.bfloat16
# conservative scoped-VMEM budget: <= default on v6e/v7x, larger than v5e's 16 MiB default
VMEM_LIMIT = 32 * 1024 * 1024


# --------------------------------------------------------------------------
# helpers
# --------------------------------------------------------------------------

def _round_up(x, m):
    return ((x + m - 1) // m) * m


def _pad2d(a, rows, cols):
    r, c = a.shape
    if r == rows and c == cols:
        return a
    return jnp.pad(a, ((0, rows - r), (0, cols - c)))


def _row_tile(T):
    tm = min(256, _round_up(T, 8))
    return tm, _round_up(T, tm)


def _ln_f32(z, g, b, eps=1e-5):
    mu = jnp.mean(z, axis=-1, keepdims=True)
    zc = z - mu
    var = jnp.mean(zc * zc, axis=-1, keepdims=True)
    return zc * jax.lax.rsqrt(var + eps) * g + b


# --------------------------------------------------------------------------
# tiled linear (matmul + bias)
# --------------------------------------------------------------------------

def _matmul_kernel(x_ref, w_ref, b_ref, o_ref, acc_ref):
    @pl.when(pl.program_id(2) == 0)
    def _init():
        acc_ref[...] = jnp.zeros_like(acc_ref)

    acc_ref[...] += jnp.dot(x_ref[...].astype(MXU_DTYPE),
                            w_ref[...].astype(MXU_DTYPE),
                            preferred_element_type=jnp.float32)

    @pl.when(pl.program_id(2) == pl.num_programs(2) - 1)
    def _finalize():
        o_ref[...] = (acc_ref[...] + b_ref[...]).astype(o_ref.dtype)


def linear(x2d, w, b):
    """y = x2d @ w + b with a tiled, pipelined Pallas matmul.  x2d: [T, K]."""
    T, K = x2d.shape
    N = w.shape[1]
    tm = min(256, _round_up(T, 8))
    tk = min(512, _round_up(K, 128))
    tn = min(512, _round_up(N, 128))
    Tp, Kp, Np = _round_up(T, tm), _round_up(K, tk), _round_up(N, tn)

    xp = _pad2d(x2d, Tp, Kp)
    wp = _pad2d(w, Kp, Np)
    bp = _pad2d(b.reshape(1, N), 1, Np)

    out = pl.pallas_call(
        _matmul_kernel,
        out_shape=jax.ShapeDtypeStruct((Tp, Np), x2d.dtype),
        grid=(Tp // tm, Np // tn, Kp // tk),
        in_specs=[pl.BlockSpec((tm, tk), lambda i, j, k: (i, k)),
                  pl.BlockSpec((tk, tn), lambda i, j, k: (k, j)),
                  pl.BlockSpec((1, tn), lambda i, j, k: (0, j))],
        out_specs=pl.BlockSpec((tm, tn), lambda i, j, k: (i, j)),
        scratch_shapes=[pltpu.VMEM((tm, tn), jnp.float32)],
        compiler_params=pltpu.CompilerParams(
            dimension_semantics=("parallel", "parallel", "arbitrary"),
            vmem_limit_bytes=VMEM_LIMIT),
        cost_estimate=pl.CostEstimate(
            flops=2 * Tp * Kp * Np,
            transcendentals=0,
            bytes_accessed=4 * (Tp * Kp + Kp * Np + Tp * Np)),
    )(xp, wp, bp)

    if (Tp, Np) != (T, N):
        out = out[:T, :N]
    return out


# --------------------------------------------------------------------------
# multi-head self attention (all heads of one batch element per grid step)
# --------------------------------------------------------------------------

def _mha_kernel(qkv_ref, o_ref, *, num_heads, scale):
    S = qkv_ref.shape[1]
    D = qkv_ref.shape[2] // 3
    Dh = D // num_heads

    qkv = qkv_ref[0]                                        # (S, 3D) f32

    # causal mask generated in-kernel: no [S, S] HBM operand / DMA.
    row = jax.lax.broadcasted_iota(jnp.int32, (S, S), 0)
    col = jax.lax.broadcasted_iota(jnp.int32, (S, S), 1)
    allow = col <= row

    head_outs = []
    for h in range(num_heads):
        lo = h * Dh
        q = (qkv[:, lo:lo + Dh] * scale).astype(MXU_DTYPE)              # (S, Dh)
        k = qkv[:, D + lo:D + lo + Dh].astype(MXU_DTYPE)                # (S, Dh)
        v = qkv[:, 2 * D + lo:2 * D + lo + Dh].astype(MXU_DTYPE)        # (S, Dh)

        # q @ k^T without materializing a transpose: contract last dim of both.
        s = jax.lax.dot_general(q, k, (((1,), (1,)), ((), ())),
                                preferred_element_type=jnp.float32)     # (S, S)
        s = jnp.where(allow, s, -1e30)
        s = s - jnp.max(s, axis=-1, keepdims=True)
        p = jnp.exp(s)
        p = p * pl.reciprocal(jnp.sum(p, axis=-1, keepdims=True), approx=True)
        head_outs.append(jnp.dot(p.astype(MXU_DTYPE), v,
                                 preferred_element_type=jnp.float32))   # (S, Dh)

    o_ref[0] = jnp.concatenate(head_outs, axis=-1).astype(o_ref.dtype)  # (S, D)


def mha_attention(qkv, num_heads, scale):
    """qkv: [B, S, 3D] (q|k|v concatenated along features).  Returns [B, S, D]."""
    # TODO(synk): for long sequences switch to a flash-style KV-tiled online-softmax
    # loop so the per-head [S, S] score tensor never has to fit in VMEM (v7x: 64 MiB).
    B, S, D3 = qkv.shape
    D = D3 // 3
    Dh = D // num_heads
    return pl.pallas_call(
        functools.partial(_mha_kernel, num_heads=num_heads, scale=scale),
        out_shape=jax.ShapeDtypeStruct((B, S, D), qkv.dtype),
        grid=(B,),
        in_specs=[pl.BlockSpec((1, S, D3), lambda b: (b, 0, 0))],
        out_specs=pl.BlockSpec((1, S, D), lambda b: (b, 0, 0)),
        compiler_params=pltpu.CompilerParams(
            dimension_semantics=("parallel",), vmem_limit_bytes=VMEM_LIMIT),
        cost_estimate=pl.CostEstimate(
            flops=4 * B * num_heads * S * S * Dh,
            transcendentals=B * num_heads * S * S,
            bytes_accessed=4 * (B * S * D3 + B * S * D)),
    )(qkv)


# --------------------------------------------------------------------------
# fused: out_proj + residual + LayerNorm1      (row tiled)
# --------------------------------------------------------------------------

def _proj_add_ln_kernel(a_ref, x_ref, w_ref, b_ref, g_ref, be_ref, o_ref):
    y = jnp.dot(a_ref[...].astype(MXU_DTYPE), w_ref[...].astype(MXU_DTYPE),
                preferred_element_type=jnp.float32)
    z = x_ref[...].astype(jnp.float32) + y + b_ref[...]
    o_ref[...] = _ln_f32(z, g_ref[...], be_ref[...]).astype(o_ref.dtype)


def proj_add_ln(attn2d, x2d, w, b, g, beta):
    T, D = x2d.shape
    tm, Tp = _row_tile(T)
    ap, xp = _pad2d(attn2d, Tp, D), _pad2d(x2d, Tp, D)
    row = pl.BlockSpec((tm, D), lambda i: (i, 0))
    res = lambda r, c: pl.BlockSpec((r, c), lambda i: (0, 0))   # resident block
    out = pl.pallas_call(
        _proj_add_ln_kernel,
        out_shape=jax.ShapeDtypeStruct((Tp, D), x2d.dtype),
        grid=(Tp // tm,),
        in_specs=[row, row, res(D, D), res(1, D), res(1, D), res(1, D)],
        out_specs=row,
        compiler_params=pltpu.CompilerParams(
            dimension_semantics=("parallel",), vmem_limit_bytes=VMEM_LIMIT),
    )(ap, xp, w, b.reshape(1, D), g.reshape(1, D), beta.reshape(1, D))
    return out[:T] if Tp != T else out


# --------------------------------------------------------------------------
# fused: FFN (linear1 -> ReLU -> linear2) + residual + LayerNorm2   (row tiled)
# --------------------------------------------------------------------------

def _ffn_ln_kernel(h_ref, w1_ref, b1_ref, w2_ref, b2_ref, g_ref, be_ref, o_ref):
    h = h_ref[...]
    u = jnp.dot(h.astype(MXU_DTYPE), w1_ref[...].astype(MXU_DTYPE),
                preferred_element_type=jnp.float32) + b1_ref[...]
    u = jnp.maximum(u, 0.0)
    y = jnp.dot(u.astype(MXU_DTYPE), w2_ref[...].astype(MXU_DTYPE),
                preferred_element_type=jnp.float32) + b2_ref[...]
    z = h.astype(jnp.float32) + y
    o_ref[...] = _ln_f32(z, g_ref[...], be_ref[...]).astype(o_ref.dtype)


def ffn_ln(h2d, w1, b1, w2, b2, g, beta):
    T, D = h2d.shape
    Hf = w1.shape[1]
    tm, Tp = _row_tile(T)
    hp = _pad2d(h2d, Tp, D)
    row = pl.BlockSpec((tm, D), lambda i: (i, 0))
    res = lambda r, c: pl.BlockSpec((r, c), lambda i: (0, 0))
    out = pl.pallas_call(
        _ffn_ln_kernel,
        out_shape=jax.ShapeDtypeStruct((Tp, D), h2d.dtype),
        grid=(Tp // tm,),
        in_specs=[row, res(D, Hf), res(1, Hf), res(Hf, D), res(1, D),
                  res(1, D), res(1, D)],
        out_specs=row,
        compiler_params=pltpu.CompilerParams(
            dimension_semantics=("parallel",), vmem_limit_bytes=VMEM_LIMIT),
        cost_estimate=pl.CostEstimate(
            flops=4 * Tp * D * Hf, transcendentals=0,
            bytes_accessed=4 * (2 * Tp * D + 2 * D * Hf)),
    )(hp, w1, b1.reshape(1, Hf), w2, b2.reshape(1, D),
      g.reshape(1, D), beta.reshape(1, D))
    return out[:T] if Tp != T else out


# --------------------------------------------------------------------------
# model (parameter setup + forward, eval mode)
# --------------------------------------------------------------------------

def make_positional_encoding(d_model, max_len=512):
    position = jnp.arange(max_len, dtype=jnp.float32)[:, None]
    div_term = jnp.exp(jnp.arange(0, d_model, 2, dtype=jnp.float32)
                       * (-math.log(10000.0) / d_model))
    pe_sin = jnp.sin(position * div_term)
    pe_cos = jnp.cos(position * div_term)
    return jnp.stack([pe_sin, pe_cos], axis=-1).reshape(max_len, d_model)


def init_params(key, *, input_size, num_sources, dmodel, num_heads,
                num_layers, hidden_size, num_splits):
    def u(k, shape, rng=0.1):
        return jax.random.uniform(k, shape, jnp.float32, -rng, rng)

    keys = jax.random.split(key, 4 + 8 * num_layers)
    ki = iter(keys)
    params = {
        "enc_w": u(next(ki), (2 * input_size, num_splits * dmodel)),
        "enc_b": u(next(ki), (num_splits * dmodel,)),
        "dec_w": u(next(ki), (dmodel, 2 * num_sources * input_size // num_splits)),
        "dec_b": jnp.zeros((2 * num_sources * input_size // num_splits,), jnp.float32),
        "pe": make_positional_encoding(dmodel),
        "layers": [],
    }
    for _ in range(num_layers):
        params["layers"].append({
            "in_w": u(next(ki), (dmodel, 3 * dmodel)),
            "in_b": u(next(ki), (3 * dmodel,)),
            "out_w": u(next(ki), (dmodel, dmodel)),
            "out_b": u(next(ki), (dmodel,)),
            "ff1_w": u(next(ki), (dmodel, hidden_size)),
            "ff1_b": u(next(ki), (hidden_size,)),
            "ff2_w": u(next(ki), (hidden_size, dmodel)),
            "ff2_b": u(next(ki), (dmodel,)),
            "ln1_g": jnp.ones((dmodel,), jnp.float32),
            "ln1_b": jnp.zeros((dmodel,), jnp.float32),
            "ln2_g": jnp.ones((dmodel,), jnp.float32),
            "ln2_b": jnp.zeros((dmodel,), jnp.float32),
        })
    return params


def encoder_layer_fwd(h, p, num_heads):
    """Post-norm TransformerEncoderLayer (eval mode).  h: [B, S, D] batch-first."""
    B, S, D = h.shape
    Dh = D // num_heads
    h2 = h.reshape(B * S, D)

    qkv = linear(h2, p["in_w"], p["in_b"])                       # [B*S, 3D]
    attn = mha_attention(qkv.reshape(B, S, 3 * D), num_heads,
                         1.0 / math.sqrt(Dh))                    # [B, S, D]
    h2 = proj_add_ln(attn.reshape(B * S, D), h2,
                     p["out_w"], p["out_b"], p["ln1_g"], p["ln1_b"])
    h2 = ffn_ln(h2, p["ff1_w"], p["ff1_b"], p["ff2_w"], p["ff2_b"],
                p["ln2_g"], p["ln2_b"])
    return h2.reshape(B, S, D)


def transformer_forward(x, params, *, num_sources, dmodel, num_heads, num_splits):
    # TODO(synk): training-mode dropout is not implemented (eval-mode identity only).
    b, _, n, m = x.shape
    ns, s = num_splits, num_sources
    S = ns * n

    # [b, 2, n, m] -> [b, n, 2*m]   (batch-first token layout: same math as the
    # seq-first reference, but no per-layer seq/batch/head transposes are needed)
    h = jnp.transpose(x, (0, 2, 1, 3)).reshape(b, n, 2 * m)

    # encoder linear
    h = linear(h.reshape(b * n, 2 * m), params["enc_w"], params["enc_b"])
    h = h.reshape(b, n, ns * dmodel)

    # split into ns chunks, add positional encoding, scale, concat along time
    pe = params["pe"][:n][None, :, :]                            # [1, n, dmodel]
    scale = math.sqrt(dmodel)
    chunks = [(c + pe) * scale for c in jnp.split(h, ns, axis=-1)]
    h = jnp.concatenate(chunks, axis=1)                          # [b, S, dmodel]

    # transformer encoder stack (causal mask over S tokens built inside the kernel)
    for layer in params["layers"]:
        h = encoder_layer_fwd(h, layer, num_heads)

    # decoder linear
    dout = 2 * s * m // ns
    z = linear(h.reshape(b * S, dmodel), params["dec_w"], params["dec_b"])
    z = z.reshape(b, S, dout)

    # reassemble: split time back into ns chunks, concat along features
    z = jnp.concatenate(jnp.split(z, ns, axis=1), axis=-1)       # [b, n, 2*s*m]
    z = z.reshape(b, n, s, 2, m)
    return jnp.transpose(z, (0, 2, 3, 1, 4))                     # [b, s, 2, n, m]


# --------------------------------------------------------------------------
# Demo
# --------------------------------------------------------------------------

if __name__ == "__main__":
    input_size = 8      # m (freq bins)
    num_sources = 2     # s
    dmodel = 32
    num_heads = 4
    num_layers = 2
    hidden_size = 64
    num_splits = 2      # ns
    batch = 2
    n_frames = 8        # n

    key = jax.random.PRNGKey(0)
    kx, kp = jax.random.split(key)

    x = jax.random.normal(kx, (batch, 2, n_frames, input_size), jnp.float32)
    params = init_params(kp, input_size=input_size, num_sources=num_sources,
                         dmodel=dmodel, num_heads=num_heads,
                         num_layers=num_layers, hidden_size=hidden_size,
                         num_splits=num_splits)

    fwd = functools.partial(transformer_forward, num_sources=num_sources,
                            dmodel=dmodel, num_heads=num_heads,
                            num_splits=num_splits)

    out = jax.jit(lambda a: fwd(a, params))(x)
    out = jax.block_until_ready(out)

    expected = (batch, num_sources, 2, n_frames, input_size)
    assert out.shape == expected, (out.shape, expected)
    assert jnp.all(jnp.isfinite(out))
    print("KERNEL_OK")
</pallas_src>

<mosaic_0001>
module attributes {stable_mosaic.version = 11 : i64} {
  func.func @_matmul_kernel(%arg0: i32, %arg1: i32, %arg2: i32, %arg3: memref<16x128xf32, #tpu.memory_space<vmem>>, %arg4: memref<128x128xf32, #tpu.memory_space<vmem>>, %arg5: memref<1x128xf32, #tpu.memory_space<vmem>>, %arg6: memref<16x128xf32, #tpu.memory_space<vmem>>, %arg7: memref<16x128xf32, #tpu.memory_space<vmem>>) attributes {dimension_semantics = [#tpu.dimension_semantics<parallel>, #tpu.dimension_semantics<parallel>, #tpu.dimension_semantics<arbitrary>], iteration_bounds = array<i64: 1, 1, 1>, scalar_prefetch = 0 : i64, scratch_operands = 1 : i64, tpu.core_type = #tpu.core_type<tc>, window_params = [{transform_indices = @transform_0, window_bounds = array<i64: 16, 128>}, {transform_indices = @transform_1, window_bounds = array<i64: 128, 128>}, {transform_indices = @transform_2, window_bounds = array<i64: 1, 128>}, {transform_indices = @transform_3, window_bounds = array<i64: 16, 128>}]} {
    %c0_i32 = arith.constant 0 : i32
    %0 = arith.cmpi eq, %arg2, %c0_i32 : i32
    %1 = arith.extui %0 : i1 to i32
    %c0_i32_0 = arith.constant 0 : i32
    %2 = arith.cmpi ne, %1, %c0_i32_0 : i32
    scf.if %2 {
      %cst_10 = arith.constant 0.000000e+00 : f32
      %14 = vector.broadcast %cst_10 : f32 to vector<16x128xf32>
      %c0_11 = arith.constant 0 : index
      %c0_12 = arith.constant 0 : index
      %15 = vector.load %arg7[%c0_11, %c0_12] : memref<16x128xf32, #tpu.memory_space<vmem>>, vector<16x128xf32>
      tpu.vector_store %arg7[%c0_11, %c0_12], %14 {strides = array<i32>} : memref<16x128xf32, #tpu.memory_space<vmem>>, vector<16x128xf32>,
    } else {
    }
    %c0 = arith.constant 0 : index
    %c0_1 = arith.constant 0 : index
    %3 = vector.load %arg7[%c0, %c0_1] : memref<16x128xf32, #tpu.memory_space<vmem>>, vector<16x128xf32>
    %c0_2 = arith.constant 0 : index
    %c0_3 = arith.constant 0 : index
    %4 = vector.load %arg3[%c0_2, %c0_3] : memref<16x128xf32, #tpu.memory_space<vmem>>, vector<16x128xf32>
    %5 = arith.truncf %4 : vector<16x128xf32> to vector<16x128xbf16>
    %c0_4 = arith.constant 0 : index
    %c0_5 = arith.constant 0 : index
    %6 = vector.load %arg4[%c0_4, %c0_5] : memref<128x128xf32, #tpu.memory_space<vmem>>, vector<128x128xf32>
    %7 = arith.truncf %6 : vector<128x128xf32> to vector<128x128xbf16>
    %cst = arith.constant dense<0.000000e+00> : vector<16x128xf32>
    %8 = tpu.matmul %5, %7, %cst {dimension_numbers = #tpu.dot_dimension_numbers<[1], [0], [0], [1], [0, 0, 1, 1], [], []>} : vector<16x128xbf16>, vector<128x128xbf16>, vector<16x128xf32> -> vector<16x128xf32>
    %9 = arith.addf %3, %8 : vector<16x128xf32>
    %c0_6 = arith.constant 0 : index
    %c0_7 = arith.constant 0 : index
    %10 = vector.load %arg7[%c0_6, %c0_7] : memref<16x128xf32, #tpu.memory_space<vmem>>, vector<16x128xf32>
    tpu.vector_store %arg7[%c0_6, %c0_7], %9 {strides = array<i32>} : memref<16x128xf32, #tpu.memory_space<vmem>>, vector<16x128xf32>,
    %c0_i32_8 = arith.constant 0 : i32
    %11 = arith.cmpi eq, %arg2, %c0_i32_8 : i32
    %12 = arith.extui %11 : i1 to i32
    %c0_i32_9 = arith.constant 0 : i32
    %13 = arith.cmpi ne, %12, %c0_i32_9 : i32
    scf.if %13 {
      %c0_10 = arith.constant 0 : index
      %c0_11 = arith.constant 0 : index
      %14 = vector.load %arg7[%c0_10, %c0_11] : memref<16x128xf32, #tpu.memory_space<vmem>>, vector<16x128xf32>
      %c0_12 = arith.constant 0 : index
      %c0_13 = arith.constant 0 : index
      %15 = vector.load %arg5[%c0_12, %c0_13] : memref<1x128xf32, #tpu.memory_space<vmem>>, vector<1x128xf32>
      %16 = vector.broadcast %15 : vector<1x128xf32> to vector<16x128xf32>
      %17 = arith.addf %14, %16 : vector<16x128xf32>
      %c0_14 = arith.constant 0 : index
      %c0_15 = arith.constant 0 : index
      %18 = vector.load %arg6[%c0_14, %c0_15] : memref<16x128xf32, #tpu.memory_space<vmem>>, vector<16x128xf32>
      tpu.vector_store %arg6[%c0_14, %c0_15], %17 {strides = array<i32>} : memref<16x128xf32, #tpu.memory_space<vmem>>, vector<16x128xf32>,
    } else {
    }
    return
  }
  func.func @transform_0(%arg0: i32, %arg1: i32, %arg2: i32) -> (i32, i32) {
    %c0_i32 = arith.constant 0 : i32
    return %arg0, %arg2 : i32, i32
  }
  func.func @transform_1(%arg0: i32, %arg1: i32, %arg2: i32) -> (i32, i32) {
    %c0_i32 = arith.constant 0 : i32
    return %arg2, %arg1 : i32, i32
  }
  func.func @transform_2(%arg0: i32, %arg1: i32, %arg2: i32) -> (i32, i32) {
    %c0_i32 = arith.constant 0 : i32
    %c0_i32_0 = arith.constant 0 : i32
    return %c0_i32, %arg1 : i32, i32
  }
  func.func @transform_3(%arg0: i32, %arg1: i32, %arg2: i32) -> (i32, i32) {
    %c0_i32 = arith.constant 0 : i32
    return %arg0, %arg1 : i32, i32
  }
}

module attributes {stable_mosaic.version = 11 : i64} {
  func.func @_mha_kernel(%arg0: i32, %arg1: memref<1x16x96xf32, #tpu.memory_space<vmem>>, %arg2: memref<1x16x32xf32, #tpu.memory_space<vmem>>) attributes {dimension_semantics = [#tpu.dimension_semantics<parallel>], iteration_bounds = array<i64: 2>, scalar_prefetch = 0 : i64, scratch_operands = 0 : i64, tpu.core_type = #tpu.core_type<tc>, window_params = [{transform_indices = @transform_0, window_bounds = array<i64: 1, 16, 96>}, {transform_indices = @transform_1, window_bounds = array<i64: 1, 16, 32>}]} {
    %c0 = arith.constant 0 : index
    %c0_0 = arith.constant 0 : index
    %c0_1 = arith.constant 0 : index
    %0 = vector.load %arg1[%c0, %c0_0, %c0_1] : memref<1x16x96xf32, #tpu.memory_space<vmem>>, vector<1x16x96xf32>
    %1 = vector.shape_cast %0 : vector<1x16x96xf32> to vector<16x96xf32>
    %2 = tpu.iota {dimensions = array<i32: 0>} : vector<16x16xi32>
    %3 = tpu.iota {dimensions = array<i32: 1>} : vector<16x16xi32>
    %4 = arith.cmpi sle, %3, %2 : vector<16x16xi32>
    %5 = vector.extract_strided_slice %1 {offsets = [0, 0], sizes = [16, 8], strides = [1, 1]} : vector<16x96xf32> to vector<16x8xf32>
    %cst = arith.constant 0.353553385 : f32
    %6 = vector.broadcast %cst : f32 to vector<16x8xf32>
    %7 = arith.mulf %5, %6 : vector<16x8xf32>
    %8 = arith.truncf %7 : vector<16x8xf32> to vector<16x8xbf16>
    %9 = vector.extract_strided_slice %1 {offsets = [0, 32], sizes = [16, 8], strides = [1, 1]} : vector<16x96xf32> to vector<16x8xf32>
    %10 = arith.truncf %9 : vector<16x8xf32> to vector<16x8xbf16>
    %11 = vector.extract_strided_slice %1 {offsets = [0, 64], sizes = [16, 8], strides = [1, 1]} : vector<16x96xf32> to vector<16x8xf32>
    %12 = arith.truncf %11 : vector<16x8xf32> to vector<16x8xbf16>
    %cst_2 = arith.constant dense<0.000000e+00> : vector<16x16xf32>
    %13 = tpu.matmul %8, %10, %cst_2 {dimension_numbers = #tpu.dot_dimension_numbers<[1], [1], [0], [0], [0, 0, 1, 0], [], []>} : vector<16x8xbf16>, vector<16x8xbf16>, vector<16x16xf32> -> vector<16x16xf32>
    %cst_3 = arith.constant -1.000000e+30 : f32
    %14 = vector.broadcast %cst_3 : f32 to vector<16x16xf32>
    %15 = arith.select %4, %13, %14 : vector<16x16xi1>, vector<16x16xf32>
    %cst_4 = arith.constant dense<0xFF800000> : vector<16xf32>
    %16 = vector.multi_reduction <maximumf>, %15, %cst_4 [1] : vector<16x16xf32> to vector<16xf32>
    %17 = vector.shape_cast %16 : vector<16xf32> to vector<16x1xf32>
    %18 = vector.broadcast %17 : vector<16x1xf32> to vector<16x16xf32>
    %19 = arith.subf %15, %18 : vector<16x16xf32>
    %20 = math.exp %19 : vector<16x16xf32>
    %cst_5 = arith.constant dense<0.000000e+00> : vector<16xf32>
    %21 = vector.multi_reduction <add>, %20, %cst_5 [1] : vector<16x16xf32> to vector<16xf32>
    %22 = vector.shape_cast %21 : vector<16xf32> to vector<16x1xf32>
    %23 = tpu.reciprocal %22 {approx = true} : vector<16x1xf32> -> vector<16x1xf32>
    %24 = vector.broadcast %23 : vector<16x1xf32> to vector<16x16xf32>
    %25 = arith.mulf %20, %24 : vector<16x16xf32>
    %26 = arith.truncf %25 : vector<16x16xf32> to vector<16x16xbf16>
    %cst_6 = arith.constant dense<0.000000e+00> : vector<16x8xf32>
    %27 = tpu.matmul %26, %12, %cst_6 {dimension_numbers = #tpu.dot_dimension_numbers<[1], [0], [0], [1], [0, 0, 1, 1], [], []>} : vector<16x16xbf16>, vector<16x8xbf16>, vector<16x8xf32> -> vector<16x8xf32>
    %28 = vector.extract_strided_slice %1 {offsets = [0, 8], sizes = [16, 8], strides = [1, 1]} : vector<16x96xf32> to vector<16x8xf32>
    %cst_7 = arith.constant 0.353553385 : f32
    %29 = vector.broadcast %cst_7 : f32 to vector<16x8xf32>
    %30 = arith.mulf %28, %29 : vector<16x8xf32>
    %31 = arith.truncf %30 : vector<16x8xf32> to vector<16x8xbf16>
    %32 = vector.extract_strided_slice %1 {offsets = [0, 40], sizes = [16, 8], strides = [1, 1]} : vector<16x96xf32> to vector<16x8xf32>
    %33 = arith.truncf %32 : vector<16x8xf32> to vector<16x8xbf16>
    %34 = vector.extract_strided_slice %1 {offsets = [0, 72], sizes = [16, 8], strides = [1, 1]} : vector<16x96xf32> to vector<16x8xf32>
    %35 = arith.truncf %34 : vector<16x8xf32> to vector<16x8xbf16>
    %cst_8 = arith.constant dense<0.000000e+00> : vector<16x16xf32>
    %36 = tpu.matmul %31, %33, %cst_8 {dimension_numbers = #tpu.dot_dimension_numbers<[1], [1], [0], [0], [0, 0, 1, 0], [], []>} : vector<16x8xbf16>, vector<16x8xbf16>, vector<16x16xf32> -> vector<16x16xf32>
    %cst_9 = arith.constant -1.000000e+30 : f32
    %37 = vector.broadcast %cst_9 : f32 to vector<16x16xf32>
    %38 = arith.select %4, %36, %37 : vector<16x16xi1>, vector<16x16xf32>
    %cst_10 = arith.constant dense<0xFF800000> : vector<16xf32>
    %39 = vector.multi_reduction <maximumf>, %38, %cst_10 [1] : vector<16x16xf32> to vector<16xf32>
    %40 = vector.shape_cast %39 : vector<16xf32> to vector<16x1xf32>
    %41 = vector.broadcast %40 : vector<16x1xf32> to vector<16x16xf32>
    %42 = arith.subf %38, %41 : vector<16x16xf32>
    %43 = math.exp %42 : vector<16x16xf32>
    %cst_11 = arith.constant dense<0.000000e+00> : vector<16xf32>
    %44 = vector.multi_reduction <add>, %43, %cst_11 [1] : vector<16x16xf32> to vector<16xf32>
    %45 = vector.shape_cast %44 : vector<16xf32> to vector<16x1xf32>
    %46 = tpu.reciprocal %45 {approx = true} : vector<16x1xf32> -> vector<16x1xf32>
    %47 = vector.broadcast %46 : vector<16x1xf32> to vector<16x16xf32>
    %48 = arith.mulf %43, %47 : vector<16x16xf32>
    %49 = arith.truncf %48 : vector<16x16xf32> to vector<16x16xbf16>
    %cst_12 = arith.constant dense<0.000000e+00> : vector<16x8xf32>
    %50 = tpu.matmul %49, %35, %cst_12 {dimension_numbers = #tpu.dot_dimension_numbers<[1], [0], [0], [1], [0, 0, 1, 1], [], []>} : vector<16x16xbf16>, vector<16x8xbf16>, vector<16x8xf32> -> vector<16x8xf32>
    %51 = vector.extract_strided_slice %1 {offsets = [0, 16], sizes = [16, 8], strides = [1, 1]} : vector<16x96xf32> to vector<16x8xf32>
    %cst_13 = arith.constant 0.353553385 : f32
    %52 = vector.broadcast %cst_13 : f32 to vector<16x8xf32>
    %53 = arith.mulf %51, %52 : vector<16x8xf32>
    %54 = arith.truncf %53 : vector<16x8xf32> to vector<16x8xbf16>
    %55 = vector.extract_strided_slice %1 {offsets = [0, 48], sizes = [16, 8], strides = [1, 1]} : vector<16x96xf32> to vector<16x8xf32>
    %56 = arith.truncf %55 : vector<16x8xf32> to vector<16x8xbf16>
    %57 = vector.extract_strided_slice %1 {offsets = [0, 80], sizes = [16, 8], strides = [1, 1]} : vector<16x96xf32> to vector<16x8xf32>
    %58 = arith.truncf %57 : vector<16x8xf32> to vector<16x8xbf16>
    %cst_14 = arith.constant dense<0.000000e+00> : vector<16x16xf32>
    %59 = tpu.matmul %54, %56, %cst_14 {dimension_numbers = #tpu.dot_dimension_numbers<[1], [1], [0], [0], [0, 0, 1, 0], [], []>} : vector<16x8xbf16>, vector<16x8xbf16>, vector<16x16xf32> -> vector<16x16xf32>
    %cst_15 = arith.constant -1.000000e+30 : f32
    %60 = vector.broadcast %cst_15 : f32 to vector<16x16xf32>
    %61 = arith.select %4, %59, %60 : vector<16x16xi1>, vector<16x16xf32>
    %cst_16 = arith.constant dense<0xFF800000> : vector<16xf32>
    %62 = vector.multi_reduction <maximumf>, %61, %cst_16 [1] : vector<16x16xf32> to vector<16xf32>
    %63 = vector.shape_cast %62 : vector<16xf32> to vector<16x1xf32>
    %64 = vector.broadcast %63 : vector<16x1xf32> to vector<16x16xf32>
    %65 = arith.subf %61, %64 : vector<16x16xf32>
    %66 = math.exp %65 : vector<16x16xf32>
    %cst_17 = arith.constant dense<0.000000e+00> : vector<16xf32>
    %67 = vector.multi_reduction <add>, %66, %cst_17 [1] : vector<16x16xf32> to vector<16xf32>
    %68 = vector.shape_cast %67 : vector<16xf32> to vector<16x1xf32>
    %69 = tpu.reciprocal %68 {approx = true} : vector<16x1xf32> -> vector<16x1xf32>
    %70 = vector.broadcast %69 : vector<16x1xf32> to vector<16x16xf32>
    %71 = arith.mulf %66, %70 : vector<16x16xf32>
    %72 = arith.truncf %71 : vector<16x16xf32> to vector<16x16xbf16>
    %cst_18 = arith.constant dense<0.000000e+00> : vector<16x8xf32>
    %73 = tpu.matmul %72, %58, %cst_18 {dimension_numbers = #tpu.dot_dimension_numbers<[1], [0], [0], [1], [0, 0, 1, 1], [], []>} : vector<16x16xbf16>, vector<16x8xbf16>, vector<16x8xf32> -> vector<16x8xf32>
    %74 = vector.extract_strided_slice %1 {offsets = [0, 24], sizes = [16, 8], strides = [1, 1]} : vector<16x96xf32> to vector<16x8xf32>
    %cst_19 = arith.constant 0.353553385 : f32
    %75 = vector.broadcast %cst_19 : f32 to vector<16x8xf32>
    %76 = arith.mulf %74, %75 : vector<16x8xf32>
    %77 = arith.truncf %76 : vector<16x8xf32> to vector<16x8xbf16>
    %78 = vector.extract_strided_slice %1 {offsets = [0, 56], sizes = [16, 8], strides = [1, 1]} : vector<16x96xf32> to vector<16x8xf32>
    %79 = arith.truncf %78 : vector<16x8xf32> to vector<16x8xbf16>
    %80 = vector.extract_strided_slice %1 {offsets = [0, 88], sizes = [16, 8], strides = [1, 1]} : vector<16x96xf32> to vector<16x8xf32>
    %81 = arith.truncf %80 : vector<16x8xf32> to vector<16x8xbf16>
    %cst_20 = arith.constant dense<0.000000e+00> : vector<16x16xf32>
    %82 = tpu.matmul %77, %79, %cst_20 {dimension_numbers = #tpu.dot_dimension_numbers<[1], [1], [0], [0], [0, 0, 1, 0], [], []>} : vector<16x8xbf16>, vector<16x8xbf16>, vector<16x16xf32> -> vector<16x16xf32>
    %cst_21 = arith.constant -1.000000e+30 : f32
    %83 = vector.broadcast %cst_21 : f32 to vector<16x16xf32>
    %84 = arith.select %4, %82, %83 : vector<16x16xi1>, vector<16x16xf32>
    %cst_22 = arith.constant dense<0xFF800000> : vector<16xf32>
    %85 = vector.multi_reduction <maximumf>, %84, %cst_22 [1] : vector<16x16xf32> to vector<16xf32>
    %86 = vector.shape_cast %85 : vector<16xf32> to vector<16x1xf32>
    %87 = vector.broadcast %86 : vector<16x1xf32> to vector<16x16xf32>
    %88 = arith.subf %84, %87 : vector<16x16xf32>
    %89 = math.exp %88 : vector<16x16xf32>
    %cst_23 = arith.constant dense<0.000000e+00> : vector<16xf32>
    %90 = vector.multi_reduction <add>, %89, %cst_23 [1] : vector<16x16xf32> to vector<16xf32>
    %91 = vector.shape_cast %90 : vector<16xf32> to vector<16x1xf32>
    %92 = tpu.reciprocal %91 {approx = true} : vector<16x1xf32> -> vector<16x1xf32>
    %93 = vector.broadcast %92 : vector<16x1xf32> to vector<16x16xf32>
    %94 = arith.mulf %89, %93 : vector<16x16xf32>
    %95 = arith.truncf %94 : vector<16x16xf32> to vector<16x16xbf16>
    %cst_24 = arith.constant dense<0.000000e+00> : vector<16x8xf32>
    %96 = tpu.matmul %95, %81, %cst_24 {dimension_numbers = #tpu.dot_dimension_numbers<[1], [0], [0], [1], [0, 0, 1, 1], [], []>} : vector<16x16xbf16>, vector<16x8xbf16>, vector<16x8xf32> -> vector<16x8xf32>
    %97 = tpu.concatenate %27, %50, %73, %96 in 1 : vector<16x8xf32>, vector<16x8xf32>, vector<16x8xf32>, vector<16x8xf32> -> vector<16x32xf32>
    %c0_25 = arith.constant 0 : index
    %c0_26 = arith.constant 0 : index
    %c0_27 = arith.constant 0 : index
    %98 = vector.load %arg2[%c0_25, %c0_26, %c0_27] : memref<1x16x32xf32, #tpu.memory_space<vmem>>, vector<1x16x32xf32>
    %99 = vector.shape_cast %98 : vector<1x16x32xf32> to vector<16x32xf32>
    %100 = vector.shape_cast %97 : vector<16x32xf32> to vector<1x16x32xf32>
    tpu.vector_store %arg2[%c0_25, %c0_26, %c0_27], %100 {strides = array<i32>} : memref<1x16x32xf32, #tpu.memory_space<vmem>>, vector<1x16x32xf32>,
    return
  }
  func.func @transform_0(%arg0: i32) -> (i32, i32, i32) {
    %c0_i32 = arith.constant 0 : i32
    %c0_i32_0 = arith.constant 0 : i32
    %c0_i32_1 = arith.constant 0 : i32
    return %arg0, %c0_i32, %c0_i32_0 : i32, i32, i32
  }
  func.func @transform_1(%arg0: i32) -> (i32, i32, i32) {
    %c0_i32 = arith.constant 0 : i32
    %c0_i32_0 = arith.constant 0 : i32
    %c0_i32_1 = arith.constant 0 : i32
    return %arg0, %c0_i32, %c0_i32_0 : i32, i32, i32
  }
}

module attributes {stable_mosaic.version = 11 : i64} {
  func.func @_proj_add_ln_kernel(%arg0: i32, %arg1: memref<32x32xf32, #tpu.memory_space<vmem>>, %arg2: memref<32x32xf32, #tpu.memory_space<vmem>>, %arg3: memref<32x32xf32, #tpu.memory_space<vmem>>, %arg4: memref<1x32xf32, #tpu.memory_space<vmem>>, %arg5: memref<1x32xf32, #tpu.memory_space<vmem>>, %arg6: memref<1x32xf32, #tpu.memory_space<vmem>>, %arg7: memref<32x32xf32, #tpu.memory_space<vmem>>) attributes {dimension_semantics = [#tpu.dimension_semantics<parallel>], iteration_bounds = array<i64: 1>, scalar_prefetch = 0 : i64, scratch_operands = 0 : i64, tpu.core_type = #tpu.core_type<tc>, window_params = [{transform_indices = @transform_0, window_bounds = array<i64: 32, 32>}, {transform_indices = @transform_1, window_bounds = array<i64: 32, 32>}, {pipeline_mode = #tpu.pipeline_mode<synchronous>, transform_indices = @transform_2, window_bounds = array<i64: 32, 32>}, {pipeline_mode = #tpu.pipeline_mode<synchronous>, transform_indices = @transform_3, window_bounds = array<i64: 1, 32>}, {pipeline_mode = #tpu.pipeline_mode<synchronous>, transform_indices = @transform_4, window_bounds = array<i64: 1, 32>}, {pipeline_mode = #tpu.pipeline_mode<synchronous>, transform_indices = @transform_5, window_bounds = array<i64: 1, 32>}, {transform_indices = @transform_6, window_bounds = array<i64: 32, 32>}]} {
    %c0 = arith.constant 0 : index
    %c0_0 = arith.constant 0 : index
    %0 = vector.load %arg1[%c0, %c0_0] : memref<32x32xf32, #tpu.memory_space<vmem>>, vector<32x32xf32>
    %1 = arith.truncf %0 : vector<32x32xf32> to vector<32x32xbf16>
    %c0_1 = arith.constant 0 : index
    %c0_2 = arith.constant 0 : index
    %2 = vector.load %arg3[%c0_1, %c0_2] : memref<32x32xf32, #tpu.memory_space<vmem>>, vector<32x32xf32>
    %3 = arith.truncf %2 : vector<32x32xf32> to vector<32x32xbf16>
    %cst = arith.constant dense<0.000000e+00> : vector<32x32xf32>
    %4 = tpu.matmul %1, %3, %cst {dimension_numbers = #tpu.dot_dimension_numbers<[1], [0], [0], [1], [0, 0, 1, 1], [], []>} : vector<32x32xbf16>, vector<32x32xbf16>, vector<32x32xf32> -> vector<32x32xf32>
    %c0_3 = arith.constant 0 : index
    %c0_4 = arith.constant 0 : index
    %5 = vector.load %arg2[%c0_3, %c0_4] : memref<32x32xf32, #tpu.memory_space<vmem>>, vector<32x32xf32>
    %6 = arith.addf %5, %4 : vector<32x32xf32>
    %c0_5 = arith.constant 0 : index
    %c0_6 = arith.constant 0 : index
    %7 = vector.load %arg4[%c0_5, %c0_6] : memref<1x32xf32, #tpu.memory_space<vmem>>, vector<1x32xf32>
    %8 = vector.broadcast %7 : vector<1x32xf32> to vector<32x32xf32>
    %9 = arith.addf %6, %8 : vector<32x32xf32>
    %c0_7 = arith.constant 0 : index
    %c0_8 = arith.constant 0 : index
    %10 = vector.load %arg5[%c0_7, %c0_8] : memref<1x32xf32, #tpu.memory_space<vmem>>, vector<1x32xf32>
    %c0_9 = arith.constant 0 : index
    %c0_10 = arith.constant 0 : index
    %11 = vector.load %arg6[%c0_9, %c0_10] : memref<1x32xf32, #tpu.memory_space<vmem>>, vector<1x32xf32>
    %cst_11 = arith.constant dense<0.000000e+00> : vector<32xf32>
    %12 = vector.multi_reduction <add>, %9, %cst_11 [1] : vector<32x32xf32> to vector<32xf32>
    %13 = vector.shape_cast %12 : vector<32xf32> to vector<32x1xf32>
    %cst_12 = arith.constant 3.200000e+01 : f32
    %14 = vector.broadcast %cst_12 : f32 to vector<32x1xf32>
    %15 = arith.divf %13, %14 : vector<32x1xf32>
    %16 = vector.broadcast %15 : vector<32x1xf32> to vector<32x32xf32>
    %17 = arith.subf %9, %16 : vector<32x32xf32>
    %18 = arith.mulf %17, %17 : vector<32x32xf32>
    %cst_13 = arith.constant dense<0.000000e+00> : vector<32xf32>
    %19 = vector.multi_reduction <add>, %18, %cst_13 [1] : vector<32x32xf32> to vector<32xf32>
    %20 = vector.shape_cast %19 : vector<32xf32> to vector<32x1xf32>
    %cst_14 = arith.constant 3.200000e+01 : f32
    %21 = vector.broadcast %cst_14 : f32 to vector<32x1xf32>
    %22 = arith.divf %20, %21 : vector<32x1xf32>
    %cst_15 = arith.constant 9.99999974E-6 : f32
    %23 = vector.broadcast %cst_15 : f32 to vector<32x1xf32>
    %24 = arith.addf %22, %23 : vector<32x1xf32>
    %25 = math.rsqrt %24 : vector<32x1xf32>
    %26 = vector.broadcast %25 : vector<32x1xf32> to vector<32x32xf32>
    %27 = arith.mulf %17, %26 : vector<32x32xf32>
    %28 = vector.broadcast %10 : vector<1x32xf32> to vector<32x32xf32>
    %29 = arith.mulf %27, %28 : vector<32x32xf32>
    %30 = vector.broadcast %11 : vector<1x32xf32> to vector<32x32xf32>
    %31 = arith.addf %29, %30 : vector<32x32xf32>
    %c0_16 = arith.constant 0 : index
    %c0_17 = arith.constant 0 : index
    %32 = vector.load %arg7[%c0_16, %c0_17] : memref<32x32xf32, #tpu.memory_space<vmem>>, vector<32x32xf32>
    tpu.vector_store %arg7[%c0_16, %c0_17], %31 {strides = array<i32>} : memref<32x32xf32, #tpu.memory_space<vmem>>, vector<32x32xf32>,
    return
  }
  func.func @transform_0(%arg0: i32) -> (i32, i32) {
    %c0_i32 = arith.constant 0 : i32
    %c0_i32_0 = arith.constant 0 : i32
    return %arg0, %c0_i32 : i32, i32
  }
  func.func @transform_1(%arg0: i32) -> (i32, i32) {
    %c0_i32 = arith.constant 0 : i32
    %c0_i32_0 = arith.constant 0 : i32
    return %arg0, %c0_i32 : i32, i32
  }
  func.func @transform_2(%arg0: i32) -> (i32, i32) {
    %c0_i32 = arith.constant 0 : i32
    %c0_i32_0 = arith.constant 0 : i32
    %c0_i32_1 = arith.constant 0 : i32
    return %c0_i32, %c0_i32_0 : i32, i32
  }
  func.func @transform_3(%arg0: i32) -> (i32, i32) {
    %c0_i32 = arith.constant 0 : i32
    %c0_i32_0 = arith.constant 0 : i32
    %c0_i32_1 = arith.constant 0 : i32
    return %c0_i32, %c0_i32_0 : i32, i32
  }
  func.func @transform_4(%arg0: i32) -> (i32, i32) {
    %c0_i32 = arith.constant 0 : i32
    %c0_i32_0 = arith.constant 0 : i32
    %c0_i32_1 = arith.constant 0 : i32
    return %c0_i32, %c0_i32_0 : i32, i32
  }
  func.func @transform_5(%arg0: i32) -> (i32, i32) {
    %c0_i32 = arith.constant 0 : i32
    %c0_i32_0 = arith.constant 0 : i32
    %c0_i32_1 = arith.constant 0 : i32
    return %c0_i32, %c0_i32_0 : i32, i32
  }
  func.func @transform_6(%arg0: i32) -> (i32, i32) {
    %c0_i32 = arith.constant 0 : i32
    %c0_i32_0 = arith.constant 0 : i32
    return %arg0, %c0_i32 : i32, i32
  }
}

module attributes {stable_mosaic.version = 11 : i64} {
  func.func @_matmul_kernel(%arg0: i32, %arg1: i32, %arg2: i32, %arg3: memref<32x128xf32, #tpu.memory_space<vmem>>, %arg4: memref<128x128xf32, #tpu.memory_space<vmem>>, %arg5: memref<1x128xf32, #tpu.memory_space<vmem>>, %arg6: memref<32x128xf32, #tpu.memory_space<vmem>>, %arg7: memref<32x128xf32, #tpu.memory_space<vmem>>) attributes {dimension_semantics = [#tpu.dimension_semantics<parallel>, #tpu.dimension_semantics<parallel>, #tpu.dimension_semantics<arbitrary>], iteration_bounds = array<i64: 1, 1, 1>, scalar_prefetch = 0 : i64, scratch_operands = 1 : i64, tpu.core_type = #tpu.core_type<tc>, window_params = [{transform_indices = @transform_0, window_bounds = array<i64: 32, 128>}, {transform_indices = @transform_1, window_bounds = array<i64: 128, 128>}, {transform_indices = @transform_2, window_bounds = array<i64: 1, 128>}, {transform_indices = @transform_3, window_bounds = array<i64: 32, 128>}]} {
    %c0_i32 = arith.constant 0 : i32
    %0 = arith.cmpi eq, %arg2, %c0_i32 : i32
    %1 = arith.extui %0 : i1 to i32
    %c0_i32_0 = arith.constant 0 : i32
    %2 = arith.cmpi ne, %1, %c0_i32_0 : i32
    scf.if %2 {
      %cst_10 = arith.constant 0.000000e+00 : f32
      %14 = vector.broadcast %cst_10 : f32 to vector<32x128xf32>
      %c0_11 = arith.constant 0 : index
      %c0_12 = arith.constant 0 : index
      %15 = vector.load %arg7[%c0_11, %c0_12] : memref<32x128xf32, #tpu.memory_space<vmem>>, vector<32x128xf32>
      tpu.vector_store %arg7[%c0_11, %c0_12], %14 {strides = array<i32>} : memref<32x128xf32, #tpu.memory_space<vmem>>, vector<32x128xf32>,
    } else {
    }
    %c0 = arith.constant 0 : index
    %c0_1 = arith.constant 0 : index
    %3 = vector.load %arg7[%c0, %c0_1] : memref<32x128xf32, #tpu.memory_space<vmem>>, vector<32x128xf32>
    %c0_2 = arith.constant 0 : index
    %c0_3 = arith.constant 0 : index
    %4 = vector.load %arg3[%c0_2, %c0_3] : memref<32x128xf32, #tpu.memory_space<vmem>>, vector<32x128xf32>
    %5 = arith.truncf %4 : vector<32x128xf32> to vector<32x128xbf16>
    %c0_4 = arith.constant 0 : index
    %c0_5 = arith.constant 0 : index
    %6 = vector.load %arg4[%c0_4, %c0_5] : memref<128x128xf32, #tpu.memory_space<vmem>>, vector<128x128xf32>
    %7 = arith.truncf %6 : vector<128x128xf32> to vector<128x128xbf16>
    %cst = arith.constant dense<0.000000e+00> : vector<32x128xf32>
    %8 = tpu.matmul %5, %7, %cst {dimension_numbers = #tpu.dot_dimension_numbers<[1], [0], [0], [1], [0, 0, 1, 1], [], []>} : vector<32x128xbf16>, vector<128x128xbf16>, vector<32x128xf32> -> vector<32x128xf32>
    %9 = arith.addf %3, %8 : vector<32x128xf32>
    %c0_6 = arith.constant 0 : index
    %c0_7 = arith.constant 0 : index
    %10 = vector.load %arg7[%c0_6, %c0_7] : memref<32x128xf32, #tpu.memory_space<vmem>>, vector<32x128xf32>
    tpu.vector_store %arg7[%c0_6, %c0_7], %9 {strides = array<i32>} : memref<32x128xf32, #tpu.memory_space<vmem>>, vector<32x128xf32>,
    %c0_i32_8 = arith.constant 0 : i32
    %11 = arith.cmpi eq, %arg2, %c0_i32_8 : i32
    %12 = arith.extui %11 : i1 to i32
    %c0_i32_9 = arith.constant 0 : i32
    %13 = arith.cmpi ne, %12, %c0_i32_9 : i32
    scf.if %13 {
      %c0_10 = arith.constant 0 : index
      %c0_11 = arith.constant 0 : index
      %14 = vector.load %arg7[%c0_10, %c0_11] : memref<32x128xf32, #tpu.memory_space<vmem>>, vector<32x128xf32>
      %c0_12 = arith.constant 0 : index
      %c0_13 = arith.constant 0 : index
      %15 = vector.load %arg5[%c0_12, %c0_13] : memref<1x128xf32, #tpu.memory_space<vmem>>, vector<1x128xf32>
      %16 = vector.broadcast %15 : vector<1x128xf32> to vector<32x128xf32>
      %17 = arith.addf %14, %16 : vector<32x128xf32>
      %c0_14 = arith.constant 0 : index
      %c0_15 = arith.constant 0 : index
      %18 = vector.load %arg6[%c0_14, %c0_15] : memref<32x128xf32, #tpu.memory_space<vmem>>, vector<32x128xf32>
      tpu.vector_store %arg6[%c0_14, %c0_15], %17 {strides = array<i32>} : memref<32x128xf32, #tpu.memory_space<vmem>>, vector<32x128xf32>,
    } else {
    }
    return
  }
  func.func @transform_0(%arg0: i32, %arg1: i32, %arg2: i32) -> (i32, i32) {
    %c0_i32 = arith.constant 0 : i32
    return %arg0, %arg2 : i32, i32
  }
  func.func @transform_1(%arg0: i32, %arg1: i32, %arg2: i32) -> (i32, i32) {
    %c0_i32 = arith.constant 0 : i32
    return %arg2, %arg1 : i32, i32
  }
  func.func @transform_2(%arg0: i32, %arg1: i32, %arg2: i32) -> (i32, i32) {
    %c0_i32 = arith.constant 0 : i32
    %c0_i32_0 = arith.constant 0 : i32
    return %c0_i32, %arg1 : i32, i32
  }
  func.func @transform_3(%arg0: i32, %arg1: i32, %arg2: i32) -> (i32, i32) {
    %c0_i32 = arith.constant 0 : i32
    return %arg0, %arg1 : i32, i32
  }
}

module attributes {stable_mosaic.version = 11 : i64} {
  func.func @_ffn_ln_kernel(%arg0: i32, %arg1: memref<32x32xf32, #tpu.memory_space<vmem>>, %arg2: memref<32x64xf32, #tpu.memory_space<vmem>>, %arg3: memref<1x64xf32, #tpu.memory_space<vmem>>, %arg4: memref<64x32xf32, #tpu.memory_space<vmem>>, %arg5: memref<1x32xf32, #tpu.memory_space<vmem>>, %arg6: memref<1x32xf32, #tpu.memory_space<vmem>>, %arg7: memref<1x32xf32, #tpu.memory_space<vmem>>, %arg8: memref<32x32xf32, #tpu.memory_space<vmem>>) attributes {dimension_semantics = [#tpu.dimension_semantics<parallel>], iteration_bounds = array<i64: 1>, scalar_prefetch = 0 : i64, scratch_operands = 0 : i64, tpu.core_type = #tpu.core_type<tc>, window_params = [{transform_indices = @transform_0, window_bounds = array<i64: 32, 32>}, {pipeline_mode = #tpu.pipeline_mode<synchronous>, transform_indices = @transform_1, window_bounds = array<i64: 32, 64>}, {pipeline_mode = #tpu.pipeline_mode<synchronous>, transform_indices = @transform_2, window_bounds = array<i64: 1, 64>}, {pipeline_mode = #tpu.pipeline_mode<synchronous>, transform_indices = @transform_3, window_bounds = array<i64: 64, 32>}, {pipeline_mode = #tpu.pipeline_mode<synchronous>, transform_indices = @transform_4, window_bounds = array<i64: 1, 32>}, {pipeline_mode = #tpu.pipeline_mode<synchronous>, transform_indices = @transform_5, window_bounds = array<i64: 1, 32>}, {pipeline_mode = #tpu.pipeline_mode<synchronous>, transform_indices = @transform_6, window_bounds = array<i64: 1, 32>}, {transform_indices = @transform_7, window_bounds = array<i64: 32, 32>}]} {
    %c0 = arith.constant 0 : index
    %c0_0 = arith.constant 0 : index
    %0 = vector.load %arg1[%c0, %c0_0] : memref<32x32xf32, #tpu.memory_space<vmem>>, vector<32x32xf32>
    %1 = arith.truncf %0 : vector<32x32xf32> to vector<32x32xbf16>
    %c0_1 = arith.constant 0 : index
    %c0_2 = arith.constant 0 : index
    %2 = vector.load %arg2[%c0_1, %c0_2] : memref<32x64xf32, #tpu.memory_space<vmem>>, vector<32x64xf32>
    %3 = arith.truncf %2 : vector<32x64xf32> to vector<32x64xbf16>
    %cst = arith.constant dense<0.000000e+00> : vector<32x64xf32>
    %4 = tpu.matmul %1, %3, %cst {dimension_numbers = #tpu.dot_dimension_numbers<[1], [0], [0], [1], [0, 0, 1, 1], [], []>} : vector<32x32xbf16>, vector<32x64xbf16>, vector<32x64xf32> -> vector<32x64xf32>
    %c0_3 = arith.constant 0 : index
    %c0_4 = arith.constant 0 : index
    %5 = vector.load %arg3[%c0_3, %c0_4] : memref<1x64xf32, #tpu.memory_space<vmem>>, vector<1x64xf32>
    %6 = vector.broadcast %5 : vector<1x64xf32> to vector<32x64xf32>
    %7 = arith.addf %4, %6 : vector<32x64xf32>
    %cst_5 = arith.constant 0.000000e+00 : f32
    %8 = vector.broadcast %cst_5 : f32 to vector<32x64xf32>
    %9 = arith.maximumf %7, %8 : vector<32x64xf32>
    %10 = arith.truncf %9 : vector<32x64xf32> to vector<32x64xbf16>
    %c0_6 = arith.constant 0 : index
    %c0_7 = arith.constant 0 : index
    %11 = vector.load %arg4[%c0_6, %c0_7] : memref<64x32xf32, #tpu.memory_space<vmem>>, vector<64x32xf32>
    %12 = arith.truncf %11 : vector<64x32xf32> to vector<64x32xbf16>
    %cst_8 = arith.constant dense<0.000000e+00> : vector<32x32xf32>
    %13 = tpu.matmul %10, %12, %cst_8 {dimension_numbers = #tpu.dot_dimension_numbers<[1], [0], [0], [1], [0, 0, 1, 1], [], []>} : vector<32x64xbf16>, vector<64x32xbf16>, vector<32x32xf32> -> vector<32x32xf32>
    %c0_9 = arith.constant 0 : index
    %c0_10 = arith.constant 0 : index
    %14 = vector.load %arg5[%c0_9, %c0_10] : memref<1x32xf32, #tpu.memory_space<vmem>>, vector<1x32xf32>
    %15 = vector.broadcast %14 : vector<1x32xf32> to vector<32x32xf32>
    %16 = arith.addf %13, %15 : vector<32x32xf32>
    %17 = arith.addf %0, %16 : vector<32x32xf32>
    %c0_11 = arith.constant 0 : index
    %c0_12 = arith.constant 0 : index
    %18 = vector.load %arg6[%c0_11, %c0_12] : memref<1x32xf32, #tpu.memory_space<vmem>>, vector<1x32xf32>
    %c0_13 = arith.constant 0 : index
    %c0_14 = arith.constant 0 : index
    %19 = vector.load %arg7[%c0_13, %c0_14] : memref<1x32xf32, #tpu.memory_space<vmem>>, vector<1x32xf32>
    %cst_15 = arith.constant dense<0.000000e+00> : vector<32xf32>
    %20 = vector.multi_reduction <add>, %17, %cst_15 [1] : vector<32x32xf32> to vector<32xf32>
    %21 = vector.shape_cast %20 : vector<32xf32> to vector<32x1xf32>
    %cst_16 = arith.constant 3.200000e+01 : f32
    %22 = vector.broadcast %cst_16 : f32 to vector<32x1xf32>
    %23 = arith.divf %21, %22 : vector<32x1xf32>
    %24 = vector.broadcast %23 : vector<32x1xf32> to vector<32x32xf32>
    %25 = arith.subf %17, %24 : vector<32x32xf32>
    %26 = arith.mulf %25, %25 : vector<32x32xf32>
    %cst_17 = arith.constant dense<0.000000e+00> : vector<32xf32>
    %27 = vector.multi_reduction <add>, %26, %cst_17 [1] : vector<32x32xf32> to vector<32xf32>
    %28 = vector.shape_cast %27 : vector<32xf32> to vector<32x1xf32>
    %cst_18 = arith.constant 3.200000e+01 : f32
    %29 = vector.broadcast %cst_18 : f32 to vector<32x1xf32>
    %30 = arith.divf %28, %29 : vector<32x1xf32>
    %cst_19 = arith.constant 9.99999974E-6 : f32
    %31 = vector.broadcast %cst_19 : f32 to vector<32x1xf32>
    %32 = arith.addf %30, %31 : vector<32x1xf32>
    %33 = math.rsqrt %32 : vector<32x1xf32>
    %34 = vector.broadcast %33 : vector<32x1xf32> to vector<32x32xf32>
    %35 = arith.mulf %25, %34 : vector<32x32xf32>
    %36 = vector.broadcast %18 : vector<1x32xf32> to vector<32x32xf32>
    %37 = arith.mulf %35, %36 : vector<32x32xf32>
    %38 = vector.broadcast %19 : vector<1x32xf32> to vector<32x32xf32>
    %39 = arith.addf %37, %38 : vector<32x32xf32>
    %c0_20 = arith.constant 0 : index
    %c0_21 = arith.constant 0 : index
    %40 = vector.load %arg8[%c0_20, %c0_21] : memref<32x32xf32, #tpu.memory_space<vmem>>, vector<32x32xf32>
    tpu.vector_store %arg8[%c0_20, %c0_21], %39 {strides = array<i32>} : memref<32x32xf32, #tpu.memory_space<vmem>>, vector<32x32xf32>,
    return
  }
  func.func @transform_0(%arg0: i32) -> (i32, i32) {
    %c0_i32 = arith.constant 0 : i32
    %c0_i32_0 = arith.constant 0 : i32
    return %arg0, %c0_i32 : i32, i32
  }
  func.func @transform_1(%arg0: i32) -> (i32, i32) {
    %c0_i32 = arith.constant 0 : i32
    %c0_i32_0 = arith.constant 0 : i32
    %c0_i32_1 = arith.constant 0 : i32
    return %c0_i32, %c0_i32_0 : i32, i32
  }
  func.func @transform_2(%arg0: i32) -> (i32, i32) {
    %c0_i32 = arith.constant 0 : i32
    %c0_i32_0 = arith.constant 0 : i32
    %c0_i32_1 = arith.constant 0 : i32
    return %c0_i32, %c0_i32_0 : i32, i32
  }
  func.func @transform_3(%arg0: i32) -> (i32, i32) {
    %c0_i32 = arith.constant 0 : i32
    %c0_i32_0 = arith.constant 0 : i32
    %c0_i32_1 = arith.constant 0 : i32
    return %c0_i32, %c0_i32_0 : i32, i32
  }
  func.func @transform_4(%arg0: i32) -> (i32, i32) {
    %c0_i32 = arith.constant 0 : i32
    %c0_i32_0 = arith.constant 0 : i32
    %c0_i32_1 = arith.constant 0 : i32
    return %c0_i32, %c0_i32_0 : i32, i32
  }
  func.func @transform_5(%arg0: i32) -> (i32, i32) {
    %c0_i32 = arith.constant 0 : i32
    %c0_i32_0 = arith.constant 0 : i32
    %c0_i32_1 = arith.constant 0 : i32
    return %c0_i32, %c0_i32_0 : i32, i32
  }
  func.func @transform_6(%arg0: i32) -> (i32, i32) {
    %c0_i32 = arith.constant 0 : i32
    %c0_i32_0 = arith.constant 0 : i32
    %c0_i32_1 = arith.constant 0 : i32
    return %c0_i32, %c0_i32_0 : i32, i32
  }
  func.func @transform_7(%arg0: i32) -> (i32, i32) {
    %c0_i32 = arith.constant 0 : i32
    %c0_i32_0 = arith.constant 0 : i32
    return %arg0, %c0_i32 : i32, i32
  }
}

</mosaic_0001>

<llo_original>
// kernel: _lambda_.13
$region0: #{_lambda_.13}
  #allocation0 [shape = 'u32[]', space=smem, size = 0x4, offset = 0x4, fixed_abs, tag = 'smem constant byte address 0x4 - core index']
  #allocation1 [shape = 'u32[72,128]{1,0:T(1,128)}', space=vmem, size = 0x9000, scoped, tag = 'internal scratch']
  %s0 = inlined_call_operand.vmem [shape: f32[32,32], index: 0, kind: input, shape index: {}]
  %s1 = inlined_call_operand.vmem [shape: f32[32,32], index: 1, kind: input, shape index: {}]
  %s2 = inlined_call_operand.vmem [shape: f32[32,32], index: 2, kind: input, shape index: {}]
  %s3 = inlined_call_operand.vmem [shape: f32[1,32], index: 3, kind: input, shape index: {}]
  %s4 = inlined_call_operand.vmem [shape: f32[1,32], index: 4, kind: input, shape index: {}]
  %s5 = inlined_call_operand.vmem [shape: f32[1,32], index: 5, kind: input, shape index: {}]
  %s6 = inlined_call_operand.vmem [shape: f32[32,32], index: 6, kind: output, shape index: {}]
  %s7 = sld [smem:[#allocation0]]
  $region34: #{_lambda_.13} parent=0
    _
  %s9 = ssub.s32 1, %s7
  %s10 = scalar_select 0, %s9, %s7
  // Predicated region
  $region2: #{_lambda_.13} parent=0 // pred_check
    _
  $region3: #{_lambda_.13} parent=0 // pred_check_branch
    %12 = sbr.rel (0) target = $region5
  $region4: #{_lambda_.13} parent=0 // pred_region
    _
  $region5: #{_lambda_.13} parent=0 // pred_fallthru
    _
  // Predicated region
  $region6: #{_lambda_.13} parent=0 // pred_check
    _
  $region7: #{_lambda_.13} parent=0 // pred_check_branch
    %14 = sbr.rel (0) target = $region9
  $region8: #{_lambda_.13} parent=0 // pred_region
    _
  $region9: #{_lambda_.13} parent=0 // pred_fallthru
    _
  // Predicated region
  $region10: #{_lambda_.13} parent=0 // pred_check
    _
  $region11: #{_lambda_.13} parent=0 // pred_check_branch
    %16 = sbr.rel (0) target = $region13
  $region12: #{_lambda_.13} parent=0 // pred_region
    _
  $region13: #{_lambda_.13} parent=0 // pred_fallthru
    _
  // Predicated region
  $region14: #{_lambda_.13} parent=0 // pred_check
    _
  $region15: #{_lambda_.13} parent=0 // pred_check_branch
    %18 = sbr.rel (0) target = $region17
  $region16: #{_lambda_.13} parent=0 // pred_region
    _
  $region17: #{_lambda_.13} parent=0 // pred_fallthru
    _
  // Predicated region
  $region18: #{_lambda_.13} parent=0 // pred_check
    _
  $region19: #{_lambda_.13} parent=0 // pred_check_branch
    %20 = sbr.rel (0) target = $region21
  $region20: #{_lambda_.13} parent=0 // pred_region
    _
  $region21: #{_lambda_.13} parent=0 // pred_fallthru
    _
  // Predicated region
  $region22: #{_lambda_.13} parent=0 // pred_check
    _
  $region23: #{_lambda_.13} parent=0 // pred_check_branch
    %22 = sbr.rel (0) target = $region25
  $region24: #{_lambda_.13} parent=0 // pred_region
    _
  $region25: #{_lambda_.13} parent=0 // pred_fallthru
    _
  %v24 = vld [vmem:[%s0] sm:$0xff]
  %v25 = vld [vmem:[%s0 + $0x8] sm:$0xff]
  %v26 = vld [vmem:[%s0 + $0x10] sm:$0xff]
  %v27 = vld [vmem:[%s0 + $0x18] sm:$0xff]
  %v28 = vpack.c.bf16 %v25, %v24
  %v29 = vpack.c.bf16 %v27, %v26
  %v30 = vld [vmem:[%s2] sm:$0xff]
  %v31 = vld [vmem:[%s2 + $0x8] sm:$0xff]
  %v32 = vld [vmem:[%s2 + $0x10] sm:$0xff]
  %v33 = vld [vmem:[%s2 + $0x18] sm:$0xff]
  %v34 = vpack.c.bf16 %v31, %v30
  %v35 = vpack.c.bf16 %v33, %v32
  %vm36 = vcmask 261120
  %v38 = vsel %vm36, %v28, 0
  %v41 = vsel %vm36, %v29, 0
  %43 = vmatpush.bf16.msra.mxu0 0
  %44 = vmatpush.bf16.msra.mxu0 0
  %45 = vmatpush.bf16.msra.mxu0 0
  %46 = vmatpush.bf16.msra.mxu0 0
  %47 = vmatpush.bf16.msra.mxu0 0
  %48 = vmatpush.bf16.msra.mxu0 0
  %49 = vmatpush.bf16.msra.mxu0 %v35
  %50 = vmatpush.bf16.msra.mxu0 %v34
  %51 = vmatmul.bf16.gmra.mxu0 %v38
  %v52 = vpop.f32.mrf.mxu0
  %v53 = vadd.f32 0.0, %v52
  %v54 = vpop.f32.mrf.mxu0
  %v55 = vadd.f32 0.0, %v54
  %56 = vmatmul.bf16.gmra.mxu0 %v41
  %v57 = vpop.f32.mrf.mxu0
  %v58 = vadd.f32 0.0, %v57
  %v59 = vpop.f32.mrf.mxu0
  %v60 = vadd.f32 0.0, %v59
  %61 = vdwg.mxu0
  %v62 = vld [vmem:[%s1] sm:$0xff]
  %v63 = vld [vmem:[%s1 + $0x8] sm:$0xff]
  %v64 = vld [vmem:[%s1 + $0x10] sm:$0xff]
  %v65 = vld [vmem:[%s1 + $0x18] sm:$0xff]
  %v66 = vadd.f32 %v62, %v53
  %v67 = vadd.f32 %v63, %v55
  %v68 = vadd.f32 %v64, %v58
  %v69 = vadd.f32 %v65, %v60
  %v70 = vld [vmem:[%s3] sm:$0x1]
  %v72 = vperm.slane %v70, 0
  %v74 = vadd.f32 %v66, %v72
  %v75 = vadd.f32 %v67, %v72
  %v76 = vadd.f32 %v68, %v72
  %v77 = vadd.f32 %v69, %v72
  %v78 = vld [vmem:[%s4] sm:$0x1]
  %v79 = vld [vmem:[%s5] sm:$0x1]
  %v80 = vsel %vm36, %v74, 0.0
  %81 = vadd.xlane.f32.xlu0 %v80
  %v82 = vpop.xlane.xlu0 %81
  %v83 = vsel %vm36, %v75, 0.0
  %84 = vadd.xlane.f32.xlu0 %v83
  %v85 = vpop.xlane.xlu0 %84
  %v86 = vsel %vm36, %v76, 0.0
  %87 = vadd.xlane.f32.xlu0 %v86
  %v88 = vpop.xlane.xlu0 %87
  %v89 = vsel %vm36, %v77, 0.0
  %90 = vadd.xlane.f32.xlu0 %v89
  %v91 = vpop.xlane.xlu0 %90
  %v92 = vrcp.pop 32.0
  %v93 = vmul.f32 32.0, %v92
  %v94 = vsub.f32 1.0, %v93
  %v95 = vmul.f32 %v92, %v94
  %v96 = vadd.f32 %v92, %v95
  %vm97 = vweird.f32 %v92
  %v98 = vsel %vm97, %v92, %v96
  %v99 = vmul.f32 %v82, %v98
  %v100 = vmul.f32 %v85, %v98
  %v101 = vmul.f32 %v88, %v98
  %v102 = vmul.f32 %v91, %v98
  %v103 = vsub.f32 %v74, %v99
  %v104 = vsub.f32 %v75, %v100
  %v105 = vsub.f32 %v76, %v101
  %v106 = vsub.f32 %v77, %v102
  %v107 = vmul.f32 %v103, %v103
  %v108 = vmul.f32 %v104, %v104
  %v109 = vmul.f32 %v105, %v105
  %v110 = vmul.f32 %v106, %v106
  %v111 = vsel %vm36, %v107, 0.0
  %112 = vadd.xlane.f32.xlu0 %v111
  %v113 = vpop.xlane.xlu0 %112
  %v114 = vsel %vm36, %v108, 0.0
  %115 = vadd.xlane.f32.xlu0 %v114
  %v116 = vpop.xlane.xlu0 %115
  %v117 = vsel %vm36, %v109, 0.0
  %118 = vadd.xlane.f32.xlu0 %v117
  %v119 = vpop.xlane.xlu0 %118
  %v120 = vsel %vm36, %v110, 0.0
  %121 = vadd.xlane.f32.xlu0 %v120
  %v122 = vpop.xlane.xlu0 %121
  %v123 = vmul.f32 %v113, %v98
  %v124 = vmul.f32 %v116, %v98
  %v125 = vmul.f32 %v119, %v98
  %v126 = vmul.f32 %v122, %v98
  %v127 = vadd.f32 %v123, 1e-05
  %v128 = vadd.f32 %v124, 1e-05
  %v129 = vadd.f32 %v125, 1e-05
  %v130 = vadd.f32 %v126, 1e-05
  %v131 = vrsqrt.pop %v127
  %v132 = vmul.f32 %v131, %v127
  %v133 = vmul.f32 %v132, %v131
  %v134 = vmul.f32 0.5, %v133
  %v135 = vsub.f32 1.5, %v134
  %v136 = vmul.f32 %v131, %v135
  %vm137 = vweird.f32 %v127
  %vm138 = vweird.f32 %v131
  %vm139 = vmor %vm137, %vm138
  %v140 = vsel %vm139, %v131, %v136
  %v141 = vrsqrt.pop %v128
  %v142 = vmul.f32 %v141, %v128
  %v143 = vmul.f32 %v142, %v141
  %v144 = vmul.f32 0.5, %v143
  %v145 = vsub.f32 1.5, %v144
  %v146 = vmul.f32 %v141, %v145
  %vm147 = vweird.f32 %v128
  %vm148 = vweird.f32 %v141
  %vm149 = vmor %vm147, %vm148
  %v150 = vsel %vm149, %v141, %v146
  %v151 = vrsqrt.pop %v129
  %v152 = vmul.f32 %v151, %v129
  %v153 = vmul.f32 %v152, %v151
  %v154 = vmul.f32 0.5, %v153
  %v155 = vsub.f32 1.5, %v154
  %v156 = vmul.f32 %v151, %v155
  %vm157 = vweird.f32 %v129
  %vm158 = vweird.f32 %v151
  %vm159 = vmor %vm157, %vm158
  %v160 = vsel %vm159, %v151, %v156
  %v161 = vrsqrt.pop %v130
  %v162 = vmul.f32 %v161, %v130
  %v163 = vmul.f32 %v162, %v161
  %v164 = vmul.f32 0.5, %v163
  %v165 = vsub.f32 1.5, %v164
  %v166 = vmul.f32 %v161, %v165
  %vm167 = vweird.f32 %v130
  %vm168 = vweird.f32 %v161
  %vm169 = vmor %vm167, %vm168
  %v170 = vsel %vm169, %v161, %v166
  %v171 = vmul.f32 %v103, %v140
  %v172 = vmul.f32 %v104, %v150
  %v173 = vmul.f32 %v105, %v160
  %v174 = vmul.f32 %v106, %v170
  %v176 = vperm.slane %v78, 0
  %v178 = vmul.f32 %v171, %v176
  %v179 = vmul.f32 %v172, %v176
  %v180 = vmul.f32 %v173, %v176
  %v181 = vmul.f32 %v174, %v176
  %v183 = vperm.slane %v79, 0
  %v185 = vadd.f32 %v178, %v183
  %v186 = vadd.f32 %v179, %v183
  %v187 = vadd.f32 %v180, %v183
  %v188 = vadd.f32 %v181, %v183
  %189 = vst.msk [vmem:[%s6] sm:$0xff] %vm36, %v185
  %190 = vst.msk [vmem:[%s6 + $0x8] sm:$0xff] %vm36, %v186
  %191 = vst.msk [vmem:[%s6 + $0x10] sm:$0xff] %vm36, %v187
  %192 = vst.msk [vmem:[%s6 + $0x18] sm:$0xff] %vm36, %v188
  // Predicated region
  $region26: #{_lambda_.13} parent=0 // pred_check
    _
  $region27: #{_lambda_.13} parent=0 // pred_check_branch
    %194 = sbr.rel (0) target = $region29
  $region28: #{_lambda_.13} parent=0 // pred_region
    _
  $region29: #{_lambda_.13} parent=0 // pred_fallthru
    _
  // Predicated region
  $region30: #{_lambda_.13} parent=0 // pred_check
    _
  $region31: #{_lambda_.13} parent=0 // pred_check_branch
    %196 = sbr.rel (0) target = $region33
  $region32: #{_lambda_.13} parent=0 // pred_region
    _
  $region33: #{_lambda_.13} parent=0 // pred_fallthru
    _

// kernel: _lambda_.10
$region0: #{_lambda_.10}
  #allocation0 [shape = 'u32[]', space=smem, size = 0x4, offset = 0x4, fixed_abs, tag = 'smem constant byte address 0x4 - core index']
  #allocation1 [shape = 'u32[72,128]{1,0:T(1,128)}', space=vmem, size = 0x9000, scoped, tag = 'internal scratch']
  #allocation2 [shape = 'f32[16,128]{1,0:T(8,128)}', space=vmem, size = 0x2000, scoped, tag = 'scratch operand']
  %s0 = inlined_call_operand.vmem [shape: f32[16,128], index: 0, kind: input, shape index: {}]
  %s1 = inlined_call_operand.vmem [shape: f32[128,128], index: 1, kind: input, shape index: {}]
  %s2 = inlined_call_operand.vmem [shape: f32[1,128], index: 2, kind: input, shape index: {}]
  %s3 = inlined_call_operand.vmem [shape: f32[16,128], index: 3, kind: output, shape index: {}]
  %s4 = sld [smem:[#allocation0]]
  $region30: #{_lambda_.10} parent=0
    _
  %s6 = ssub.s32 1, %s4
  %s7 = scalar_select 0, %s6, %s4
  // Predicated region
  $region2: #{_lambda_.10} parent=0 // pred_check
    _
  $region3: #{_lambda_.10} parent=0 // pred_check_branch
    %9 = sbr.rel (0) target = $region5
  $region4: #{_lambda_.10} parent=0 // pred_region
    _
  $region5: #{_lambda_.10} parent=0 // pred_fallthru
    _
  // Predicated region
  $region6: #{_lambda_.10} parent=0 // pred_check
    _
  $region7: #{_lambda_.10} parent=0 // pred_check_branch
    %11 = sbr.rel (0) target = $region9
  $region8: #{_lambda_.10} parent=0 // pred_region
    _
  $region9: #{_lambda_.10} parent=0 // pred_fallthru
    _
  // Predicated region
  $region10: #{_lambda_.10} parent=0 // pred_check
    _
  $region11: #{_lambda_.10} parent=0 // pred_check_branch
    %13 = sbr.rel (0) target = $region13
  $region12: #{_lambda_.10} parent=0 // pred_region
    _
  $region13: #{_lambda_.10} parent=0 // pred_fallthru
    _
  %p14 = scmp.eq.s32.totalorder 0, 0
  // Predicated region
  $region14: #{_lambda_.10} parent=0 // pred_check
    %p15 = pneg %p14
  $region15: #{_lambda_.10} parent=0 // pred_check_branch
    %17 = sbr.rel (%p15) target = $region17
  $region16: #{_lambda_.10} parent=0 // pred_region
    %18 = vst [vmem:[#allocation2] sm:$0xff] 0.0
    %19 = vst [vmem:[#allocation2 + $0x8] sm:$0xff] 0.0
  $region17: #{_lambda_.10} parent=0 // pred_fallthru
    _
  %v20 = vld [vmem:[#allocation2] sm:$0xff]
  %v21 = vld [vmem:[#allocation2 + $0x8] sm:$0xff]
  %v22 = vld [vmem:[%s0] sm:$0xff]
  %v23 = vld [vmem:[%s0 + $0x8] sm:$0xff]
  %v24 = vpack.c.bf16 %v23, %v22
  %v25 = vld [vmem:[%s1] sm:$0xff]
  %v26 = vld [vmem:[%s1 + $0x8] sm:$0xff]
  %v27 = vld [vmem:[%s1 + $0x10] sm:$0xff]
  %v28 = vld [vmem:[%s1 + $0x18] sm:$0xff]
  %v29 = vld [vmem:[%s1 + $0x20] sm:$0xff]
  %v30 = vld [vmem:[%s1 + $0x28] sm:$0xff]
  %v31 = vld [vmem:[%s1 + $0x30] sm:$0xff]
  %v32 = vld [vmem:[%s1 + $0x38] sm:$0xff]
  %v33 = vld [vmem:[%s1 + $0x40] sm:$0xff]
  %v34 = vld [vmem:[%s1 + $0x48] sm:$0xff]
  %v35 = vld [vmem:[%s1 + $0x50] sm:$0xff]
  %v36 = vld [vmem:[%s1 + $0x58] sm:$0xff]
  %v37 = vld [vmem:[%s1 + $0x60] sm:$0xff]
  %v38 = vld [vmem:[%s1 + $0x68] sm:$0xff]
  %v39 = vld [vmem:[%s1 + $0x70] sm:$0xff]
  %v40 = vld [vmem:[%s1 + $0x78] sm:$0xff]
  %v41 = vpack.c.bf16 %v26, %v25
  %v42 = vpack.c.bf16 %v28, %v27
  %v43 = vpack.c.bf16 %v30, %v29
  %v44 = vpack.c.bf16 %v32, %v31
  %v45 = vpack.c.bf16 %v34, %v33
  %v46 = vpack.c.bf16 %v36, %v35
  %v47 = vpack.c.bf16 %v38, %v37
  %v48 = vpack.c.bf16 %v40, %v39
  %49 = vmatpush.bf16.msra.mxu0 %v48
  %50 = vmatpush.bf16.msra.mxu0 %v47
  %51 = vmatpush.bf16.msra.mxu0 %v46
  %52 = vmatpush.bf16.msra.mxu0 %v45
  %53 = vmatpush.bf16.msra.mxu0 %v44
  %54 = vmatpush.bf16.msra.mxu0 %v43
  %55 = vmatpush.bf16.msra.mxu0 %v42
  %56 = vmatpush.bf16.msra.mxu0 %v41
  %57 = vmatmul.bf16.gmra.mxu0 %v24
  %v58 = vpop.f32.mrf.mxu0
  %v59 = vadd.f32 0.0, %v58
  %v60 = vpop.f32.mrf.mxu0
  %v61 = vadd.f32 0.0, %v60
  %62 = vdwg.mxu0
  %v63 = vadd.f32 %v20, %v59
  %v64 = vadd.f32 %v21, %v61
  %65 = vst [vmem:[#allocation2] sm:$0xff] %v63
  %66 = vst [vmem:[#allocation2 + $0x8] sm:$0xff] %v64
  // Predicated region
  $region18: #{_lambda_.10} parent=0 // pred_check
    %p67 = pneg %p14
  $region19: #{_lambda_.10} parent=0 // pred_check_branch
    %69 = sbr.rel (%p67) target = $region21
  $region20: #{_lambda_.10} parent=0 // pred_region
    %v70 = vld [vmem:[#allocation2] sm:$0xff]
    %v71 = vld [vmem:[#allocation2 + $0x8] sm:$0xff]
    %v72 = vld [vmem:[%s2] sm:$0x1]
    %v74 = vperm.slane %v72, 0
    %v76 = vadd.f32 %v70, %v74
    %v77 = vadd.f32 %v71, %v74
    %78 = vst [vmem:[%s3] sm:$0xff] %v76
    %79 = vst [vmem:[%s3 + $0x8] sm:$0xff] %v77
  $region21: #{_lambda_.10} parent=0 // pred_fallthru
    _
  // Predicated region
  $region22: #{_lambda_.10} parent=0 // pred_check
    _
  $region23: #{_lambda_.10} parent=0 // pred_check_branch
    %81 = sbr.rel (0) target = $region25
  $region24: #{_lambda_.10} parent=0 // pred_region
    _
  $region25: #{_lambda_.10} parent=0 // pred_fallthru
    _
  // Predicated region
  $region26: #{_lambda_.10} parent=0 // pred_check
    _
  $region27: #{_lambda_.10} parent=0 // pred_check_branch
    %83 = sbr.rel (0) target = $region29
  $region28: #{_lambda_.10} parent=0 // pred_region
    _
  $region29: #{_lambda_.10} parent=0 // pred_fallthru
    _

// kernel: _lambda_.11
$region0: #{_lambda_.11}
  #allocation0 [shape = 'u32[]', space=smem, size = 0x4, offset = 0x4, fixed_abs, tag = 'smem constant byte address 0x4 - core index']
  #allocation1 [shape = 'u32[72,128]{1,0:T(1,128)}', space=vmem, size = 0x9000, scoped, tag = 'internal scratch']
  #allocation2 [shape = 'f32[32,128]{1,0:T(8,128)}', space=vmem, size = 0x4000, scoped, tag = 'scratch operand']
  %s0 = inlined_call_operand.vmem [shape: f32[32,128], index: 0, kind: input, shape index: {}]
  %s1 = inlined_call_operand.vmem [shape: f32[128,128], index: 1, kind: input, shape index: {}]
  %s2 = inlined_call_operand.vmem [shape: f32[1,128], index: 2, kind: input, shape index: {}]
  %s3 = inlined_call_operand.vmem [shape: f32[32,128], index: 3, kind: output, shape index: {}]
  %s4 = sld [smem:[#allocation0]]
  $region30: #{_lambda_.11} parent=0
    _
  %s6 = ssub.s32 1, %s4
  %s7 = scalar_select 0, %s6, %s4
  // Predicated region
  $region2: #{_lambda_.11} parent=0 // pred_check
    _
  $region3: #{_lambda_.11} parent=0 // pred_check_branch
    %9 = sbr.rel (0) target = $region5
  $region4: #{_lambda_.11} parent=0 // pred_region
    _
  $region5: #{_lambda_.11} parent=0 // pred_fallthru
    _
  // Predicated region
  $region6: #{_lambda_.11} parent=0 // pred_check
    _
  $region7: #{_lambda_.11} parent=0 // pred_check_branch
    %11 = sbr.rel (0) target = $region9
  $region8: #{_lambda_.11} parent=0 // pred_region
    _
  $region9: #{_lambda_.11} parent=0 // pred_fallthru
    _
  // Predicated region
  $region10: #{_lambda_.11} parent=0 // pred_check
    _
  $region11: #{_lambda_.11} parent=0 // pred_check_branch
    %13 = sbr.rel (0) target = $region13
  $region12: #{_lambda_.11} parent=0 // pred_region
    _
  $region13: #{_lambda_.11} parent=0 // pred_fallthru
    _
  %p14 = scmp.eq.s32.totalorder 0, 0
  // Predicated region
  $region14: #{_lambda_.11} parent=0 // pred_check
    %p15 = pneg %p14
  $region15: #{_lambda_.11} parent=0 // pred_check_branch
    %17 = sbr.rel (%p15) target = $region17
  $region16: #{_lambda_.11} parent=0 // pred_region
    %18 = vst [vmem:[#allocation2] sm:$0xff] 0.0
    %19 = vst [vmem:[#allocation2 + $0x8] sm:$0xff] 0.0
    %20 = vst [vmem:[#allocation2 + $0x10] sm:$0xff] 0.0
    %21 = vst [vmem:[#allocation2 + $0x18] sm:$0xff] 0.0
  $region17: #{_lambda_.11} parent=0 // pred_fallthru
    _
  %v22 = vld [vmem:[#allocation2] sm:$0xff]
  %v23 = vld [vmem:[#allocation2 + $0x8] sm:$0xff]
  %v24 = vld [vmem:[#allocation2 + $0x10] sm:$0xff]
  %v25 = vld [vmem:[#allocation2 + $0x18] sm:$0xff]
  %v26 = vld [vmem:[%s0] sm:$0xff]
  %v27 = vld [vmem:[%s0 + $0x8] sm:$0xff]
  %v28 = vld [vmem:[%s0 + $0x10] sm:$0xff]
  %v29 = vld [vmem:[%s0 + $0x18] sm:$0xff]
  %v30 = vpack.c.bf16 %v27, %v26
  %v31 = vpack.c.bf16 %v29, %v28
  %v32 = vld [vmem:[%s1] sm:$0xff]
  %v33 = vld [vmem:[%s1 + $0x8] sm:$0xff]
  %v34 = vld [vmem:[%s1 + $0x10] sm:$0xff]
  %v35 = vld [vmem:[%s1 + $0x18] sm:$0xff]
  %v36 = vld [vmem:[%s1 + $0x20] sm:$0xff]
  %v37 = vld [vmem:[%s1 + $0x28] sm:$0xff]
  %v38 = vld [vmem:[%s1 + $0x30] sm:$0xff]
  %v39 = vld [vmem:[%s1 + $0x38] sm:$0xff]
  %v40 = vld [vmem:[%s1 + $0x40] sm:$0xff]
  %v41 = vld [vmem:[%s1 + $0x48] sm:$0xff]
  %v42 = vld [vmem:[%s1 + $0x50] sm:$0xff]
  %v43 = vld [vmem:[%s1 + $0x58] sm:$0xff]
  %v44 = vld [vmem:[%s1 + $0x60] sm:$0xff]
  %v45 = vld [vmem:[%s1 + $0x68] sm:$0xff]
  %v46 = vld [vmem:[%s1 + $0x70] sm:$0xff]
  %v47 = vld [vmem:[%s1 + $0x78] sm:$0xff]
  %v48 = vpack.c.bf16 %v33, %v32
  %v49 = vpack.c.bf16 %v35, %v34
  %v50 = vpack.c.bf16 %v37, %v36
  %v51 = vpack.c.bf16 %v39, %v38
  %v52 = vpack.c.bf16 %v41, %v40
  %v53 = vpack.c.bf16 %v43, %v42
  %v54 = vpack.c.bf16 %v45, %v44
  %v55 = vpack.c.bf16 %v47, %v46
  %56 = vmatpush.bf16.msra.mxu0 %v55
  %57 = vmatpush.bf16.msra.mxu0 %v54
  %58 = vmatpush.bf16.msra.mxu0 %v53
  %59 = vmatpush.bf16.msra.mxu0 %v52
  %60 = vmatpush.bf16.msra.mxu0 %v51
  %61 = vmatpush.bf16.msra.mxu0 %v50
  %62 = vmatpush.bf16.msra.mxu0 %v49
  %63 = vmatpush.bf16.msra.mxu0 %v48
  %64 = vmatmul.bf16.gmra.mxu0 %v30
  %v65 = vpop.f32.mrf.mxu0
  %v66 = vadd.f32 0.0, %v65
  %v67 = vpop.f32.mrf.mxu0
  %v68 = vadd.f32 0.0, %v67
  %69 = vmatmul.bf16.gmra.mxu0 %v31
  %v70 = vpop.f32.mrf.mxu0
  %v71 = vadd.f32 0.0, %v70
  %v72 = vpop.f32.mrf.mxu0
  %v73 = vadd.f32 0.0, %v72
  %74 = vdwg.mxu0
  %v75 = vadd.f32 %v22, %v66
  %v76 = vadd.f32 %v23, %v68
  %v77 = vadd.f32 %v24, %v71
  %v78 = vadd.f32 %v25, %v73
  %79 = vst [vmem:[#allocation2] sm:$0xff] %v75
  %80 = vst [vmem:[#allocation2 + $0x8] sm:$0xff] %v76
  %81 = vst [vmem:[#allocation2 + $0x10] sm:$0xff] %v77
  %82 = vst [vmem:[#allocation2 + $0x18] sm:$0xff] %v78
  // Predicated region
  $region18: #{_lambda_.11} parent=0 // pred_check
    %p83 = pneg %p14
  $region19: #{_lambda_.11} parent=0 // pred_check_branch
    %85 = sbr.rel (%p83) target = $region21
  $region20: #{_lambda_.11} parent=0 // pred_region
    %v86 = vld [vmem:[#allocation2] sm:$0xff]
    %v87 = vld [vmem:[#allocation2 + $0x8] sm:$0xff]
    %v88 = vld [vmem:[#allocation2 + $0x10] sm:$0xff]
    %v89 = vld [vmem:[#allocation2 + $0x18] sm:$0xff]
    %v90 = vld [vmem:[%s2] sm:$0x1]
    %v92 = vperm.slane %v90, 0
    %v94 = vadd.f32 %v86, %v92
    %v95 = vadd.f32 %v87, %v92
    %v96 = vadd.f32 %v88, %v92
    %v97 = vadd.f32 %v89, %v92
    %98 = vst [vmem:[%s3] sm:$0xff] %v94
    %99 = vst [vmem:[%s3 + $0x8] sm:$0xff] %v95
    %100 = vst [vmem:[%s3 + $0x10] sm:$0xff] %v96
    %101 = vst [vmem:[%s3 + $0x18] sm:$0xff] %v97
  $region21: #{_lambda_.11} parent=0 // pred_fallthru
    _
  // Predicated region
  $region22: #{_lambda_.11} parent=0 // pred_check
    _
  $region23: #{_lambda_.11} parent=0 // pred_check_branch
    %103 = sbr.rel (0) target = $region25
  $region24: #{_lambda_.11} parent=0 // pred_region
    _
  $region25: #{_lambda_.11} parent=0 // pred_fallthru
    _
  // Predicated region
  $region26: #{_lambda_.11} parent=0 // pred_check
    _
  $region27: #{_lambda_.11} parent=0 // pred_check_branch
    %105 = sbr.rel (0) target = $region29
  $region28: #{_lambda_.11} parent=0 // pred_region
    _
  $region29: #{_lambda_.11} parent=0 // pred_fallthru
    _

// kernel: _lambda_.12
$region0: #{_lambda_.12}
  #allocation0 [shape = 'u32[]', space=smem, size = 0x4, offset = 0x4, fixed_abs, tag = 'smem constant byte address 0x4 - core index']
  #allocation1 [shape = 'u32[72,128]{1,0:T(1,128)}', space=vmem, size = 0x9000, scoped, tag = 'internal scratch']
  %s0 = inlined_call_operand.vmem [shape: f32[2,16,96], index: 0, kind: input, shape index: {}]
  %s1 = inlined_call_operand.vmem [shape: f32[2,16,32], index: 1, kind: output, shape index: {}]
  %s2 = sld [smem:[#allocation0]]
  $region37: #{_lambda_.12} parent=0
    _
  %s4 = ssub.s32 1, %s2
  %s5 = scalar_select 0, %s4, %s2
  loop: start=0, step=1, limit=4
  $region2: #{_lambda_.12} parent=0 // loop_pre_header
    _
  $region3: #{_lambda_.12} parent=0 // loop_header
    %s7 = sphi 0, %s11
    %p8 = scmp.ge.s32.totalorder %s7, 4
    %s17 = sphi 0, %s19
    %s20 = sphi 0, %s17
    %s21 = sphi 0, %s20
    %s37 = sphi 0, %s21
    %s43 = sphi 0, %s45
    %s46 = sphi 0, %s43
    %s47 = sphi 0, %s46
    %s63 = sphi 0, %s47
  $region4: #{_lambda_.12} parent=0 // loop_header_branch
    %10 = sbr.rel (%p8) target = $region8
  $region5: #{_lambda_.12} parent=0 // loop_body
    %s12 = ssub.s32 %s7, 1
    %s13 = ssub.s32 %s7, 2
    %s14 = sadd.s32 %s7, 1
    %s15 = ssub.s32 %s7, %s14
    %p16 = scmp.eq.s32.totalorder %s15, 0
    %s18 = sadd.s32 %s17, 1
    %s19 = scalar_select %p16, %s17, %s18
    %p22 = pneg %p16
    %p23 = scmp.eq.s32.totalorder %s7, 1
    %p24 = por %p22, %p23
    %p25 = scmp.ne.s32.totalorder %s17, %s20
    %p26 = scmp.eq.s32.totalorder %s7, 0
    %p27 = por %p25, %p26
    %p28 = scmp.ne.s32.totalorder %s17, %s20
    %p29 = scmp.eq.s32.totalorder %s12, 1
    %p30 = por %p28, %p29
    %p31 = scmp.ne.s32.totalorder %s20, %s21
    %p32 = scmp.eq.s32.totalorder %s12, 0
    %p33 = por %p31, %p32
    %p34 = scmp.ne.s32.totalorder %s20, %s21
    %p35 = scmp.eq.s32.totalorder %s13, 1
    %p36 = por %p34, %p35
    %p38 = scmp.ne.s32.totalorder %s21, %s37
    %p39 = scmp.eq.s32.totalorder %s13, 0
    %p40 = por %p38, %p39
    %s41 = ssub.s32 %s7, %s14
    %p42 = scmp.eq.s32.totalorder %s41, 0
    %s44 = sadd.s32 %s43, 1
    %s45 = scalar_select %p42, %s43, %s44
    %p48 = pneg %p42
    %p49 = scmp.eq.s32.totalorder %s7, 1
    %p50 = por %p48, %p49
    %p51 = scmp.ne.s32.totalorder %s43, %s46
    %p52 = scmp.eq.s32.totalorder %s7, 0
    %p53 = por %p51, %p52
    %p54 = scmp.ne.s32.totalorder %s43, %s46
    %p55 = scmp.eq.s32.totalorder %s12, 1
    %p56 = por %p54, %p55
    %p57 = scmp.ne.s32.totalorder %s46, %s47
    %p58 = scmp.eq.s32.totalorder %s12, 0
    %p59 = por %p57, %p58
    %p60 = scmp.ne.s32.totalorder %s46, %s47
    %p61 = scmp.eq.s32.totalorder %s13, 1
    %p62 = por %p60, %p61
    %p64 = scmp.ne.s32.totalorder %s47, %s63
    %p65 = scmp.eq.s32.totalorder %s13, 0
    %p66 = por %p64, %p65
    %p67 = scmp.le.s32.totalorder 1, %s7
    %p68 = scmp.lt.s32.totalorder %s7, 3
    %p69 = pnand %p67, %p68
    %p70 = pneg %p69
    // Predicated region
    $region9: #{_lambda_.12} parent=5 // pred_check
      _
    $region10: #{_lambda_.12} parent=5 // pred_check_branch
      %72 = sbr.rel (%p69) target = $region12
    $region11: #{_lambda_.12} parent=5 // pred_region
      %s73 = ssub.s32 %s7, 1
    $region12: #{_lambda_.12} parent=5 // pred_fallthru
      _
    %p74 = scmp.lt.s32.totalorder %s7, 2
    // Predicated region
    $region13: #{_lambda_.12} parent=5 // pred_check
      %p75 = pneg %p74
    $region14: #{_lambda_.12} parent=5 // pred_check_branch
      %77 = sbr.rel (%p75) target = $region16
    $region15: #{_lambda_.12} parent=5 // pred_region
      // Predicated region
      $region17: #{_lambda_.12} parent=15 // pred_check
        %p78 = pneg %p27
      $region18: #{_lambda_.12} parent=15 // pred_check_branch
        %80 = sbr.rel (%p78) target = $region20
      $region19: #{_lambda_.12} parent=15 // pred_region
        %p81 = scmp.lt.s32.totalorder %s7, 1
        %s82 = scalar_select %p81, %s7, 1
        %s83 = smul.addr %s82, 2
        %s84 = smul.addr %s83, 8
        %s85 = scalar_lea.vmem %s0, %s84
      $region20: #{_lambda_.12} parent=15 // pred_fallthru
        _
    $region16: #{_lambda_.12} parent=5 // pred_fallthru
      _
    %p86 = scmp.le.s32.totalorder 1, %s7
    %p87 = scmp.lt.s32.totalorder %s7, 3
    %p88 = pnand %p86, %p87
    %p89 = pneg %p88
    // Predicated region
    $region21: #{_lambda_.12} parent=5 // pred_check
      _
    $region22: #{_lambda_.12} parent=5 // pred_check_branch
      %91 = sbr.rel (%p88) target = $region24
    $region23: #{_lambda_.12} parent=5 // pred_region
      %s92 = ssub.s32 %s7, 1
      %p93 = scmp.lt.s32.totalorder %s12, 1
      %s94 = scalar_select %p93, %s12, 1
      %s95 = smul.addr %s94, 2
      %s96 = smul.addr %s95, 8
      %s97 = scalar_lea.vmem %s0, %s96
      %p98 = pneg %p33
      %p99 = pneg %p30
      %p100 = pneg %p59
      %p101 = pneg %p56
      %p102 = scmp.lt.s32.totalorder %s12, 1
      %s103 = scalar_select %p102, %s12, 1
      %s104 = smul.addr %s103, 2
      %s105 = smul.addr %s104, 8
      %s106 = scalar_lea.vmem %s1, %s105
      %p107 = scmp.lt.s32.totalorder %s12, 1
      %s108 = scalar_select %p107, %s12, 1
      %s109 = smul.addr %s108, 2
      %s110 = smul.addr %s109, 8
      %s111 = scalar_lea.vmem %s0, %s110
      %p112 = scmp.lt.s32.totalorder %s12, 1
      %s113 = scalar_select %p112, %s12, 1
      %s114 = smul.addr %s113, 2
      %s115 = smul.addr %s114, 8
      %s116 = scalar_lea.vmem %s1, %s115
      %v118 = vld [vmem:[%s111] sm:$0xff]
      %v119 = vld [vmem:[%s111 + $0x8] sm:$0xff]
      %v120 = vlaneseq
      %v121 = vshrl.u32 %v120, 7
      %v122 = vadd.s32 %v121, 8
      %v123 = vlaneseq
      %v124 = vand.u32 %v123, 127
      %vm125 = vcmp.le.s32.totalorder %v124, %v121
      %vm126 = vcmp.le.s32.totalorder %v124, %v122
      %v127 = vmul.f32 %v118, 0.35355338
      %v128 = vmul.f32 %v119, 0.35355338
      %v129 = vpack.c.bf16 %v128, %v127
      %v130 = vpack.c.bf16 %v119, %v118
      %132 = vrot.lane.b32.xlu0 %v130, 96
      %v133 = vpop.permute.xlu0 %132
      %vm134 = vcmask 64512
      %v136 = vsel %vm134, %v129, 0
      %v139 = vsel %vm134, %v133, 0
      %141 = vmatpush.bf16.xpose.msra.mxu0 0
      %142 = vmatpush.bf16.xpose.msra.mxu0 0
      %143 = vmatpush.bf16.xpose.msra.mxu0 0
      %144 = vmatpush.bf16.xpose.msra.mxu0 0
      %145 = vmatpush.bf16.xpose.msra.mxu0 0
      %146 = vmatpush.bf16.xpose.msra.mxu0 0
      %147 = vmatpush.bf16.xpose.msra.mxu0 0
      %148 = vmatpush.bf16.xpose.msra.mxu0 %v139
      %149 = vmatmul.bf16.gmra.mxu0 %v136
      %v150 = vpop.f32.mrf.mxu0
      %v151 = vadd.f32 0.0, %v150
      %v152 = vpop.f32.mrf.mxu0
      %v153 = vadd.f32 0.0, %v152
      %154 = vdwg.mxu0
      %v155 = vsel %vm125, %v151, -1e+30
      %v156 = vsel %vm126, %v153, -1e+30
      %vm157 = vcmask 130048
      %v158 = vsel %vm157, %v155, -inf
      %159 = vmax.xlane.f32.xlu0 %v158
      %v160 = vpop.xlane.xlu0 %159
      %v161 = vsel %vm157, %v156, -inf
      %162 = vmax.xlane.f32.xlu0 %v161
      %v163 = vpop.xlane.xlu0 %162
      %v164 = vsub.f32 %v155, %v160
      %v165 = vsub.f32 %v156, %v163
      %v166 = vmul.f32 %v164, 1.442695
      %v167 = vpow.pop %v166
      %v168 = vmul.f32 %v165, 1.442695
      %v169 = vpow.pop %v168
      %v170 = vsel %vm157, %v167, 0.0
      %171 = vadd.xlane.f32.xlu0 %v170
      %v172 = vpop.xlane.xlu0 %171
      %v173 = vsel %vm157, %v169, 0.0
      %174 = vadd.xlane.f32.xlu0 %v173
      %v175 = vpop.xlane.xlu0 %174
      %v176 = vrcp.pop %v172
      %v177 = vrcp.pop %v175
      %v178 = vmul.f32 %v167, %v176
      %v179 = vmul.f32 %v169, %v177
      %v180 = vpack.c.bf16 %v179, %v178
      %181 = vrot.lane.b32.xlu0 %v130, 64
      %v182 = vpop.permute.xlu0 %181
      %v185 = vsel %vm157, %v180, 0
      %187 = vmatpush.bf16.msra.mxu0 0
      %188 = vmatpush.bf16.msra.mxu0 0
      %189 = vmatpush.bf16.msra.mxu0 0
      %190 = vmatpush.bf16.msra.mxu0 0
      %191 = vmatpush.bf16.msra.mxu0 0
      %192 = vmatpush.bf16.msra.mxu0 0
      %193 = vmatpush.bf16.msra.mxu0 0
      %194 = vmatpush.bf16.msra.mxu0 %v182
      %195 = vmatmul.bf16.gmra.mxu0 %v185
      %v196 = vpop.f32.mrf.mxu0
      %v197 = vadd.f32 0.0, %v196
      %v198 = vpop.f32.mrf.mxu0
      %v199 = vadd.f32 0.0, %v198
      %200 = vdwg.mxu0
      %202 = vrot.lane.b32.xlu0 %v129, 120
      %v203 = vpop.permute.xlu0 %202
      %204 = vrot.lane.b32.xlu0 %v130, 88
      %v205 = vpop.permute.xlu0 %204
      %v207 = vsel %vm134, %v203, 0
      %v210 = vsel %vm134, %v205, 0
      %212 = vmatpush.bf16.xpose.msra.mxu0 0
      %213 = vmatpush.bf16.xpose.msra.mxu0 0
      %214 = vmatpush.bf16.xpose.msra.mxu0 0
      %215 = vmatpush.bf16.xpose.msra.mxu0 0
      %216 = vmatpush.bf16.xpose.msra.mxu0 0
      %217 = vmatpush.bf16.xpose.msra.mxu0 0
      %218 = vmatpush.bf16.xpose.msra.mxu0 0
      %219 = vmatpush.bf16.xpose.msra.mxu0 %v210
      %220 = vmatmul.bf16.gmra.mxu0 %v207
      %v221 = vpop.f32.mrf.mxu0
      %v222 = vadd.f32 0.0, %v221
      %v223 = vpop.f32.mrf.mxu0
      %v224 = vadd.f32 0.0, %v223
      %225 = vdwg.mxu0
      %v226 = vsel %vm125, %v222, -1e+30
      %v227 = vsel %vm126, %v224, -1e+30
      %v228 = vsel %vm157, %v226, -inf
      %229 = vmax.xlane.f32.xlu0 %v228
      %v230 = vpop.xlane.xlu0 %229
      %v231 = vsel %vm157, %v227, -inf
      %232 = vmax.xlane.f32.xlu0 %v231
      %v233 = vpop.xlane.xlu0 %232
      %v234 = vsub.f32 %v226, %v230
      %v235 = vsub.f32 %v227, %v233
      %v236 = vmul.f32 %v234, 1.442695
      %v237 = vpow.pop %v236
      %v238 = vmul.f32 %v235, 1.442695
      %v239 = vpow.pop %v238
      %v240 = vsel %vm157, %v237, 0.0
      %241 = vadd.xlane.f32.xlu0 %v240
      %v242 = vpop.xlane.xlu0 %241
      %v243 = vsel %vm157, %v239, 0.0
      %244 = vadd.xlane.f32.xlu0 %v243
      %v245 = vpop.xlane.xlu0 %244
      %v246 = vrcp.pop %v242
      %v247 = vrcp.pop %v245
      %v248 = vmul.f32 %v237, %v246
      %v249 = vmul.f32 %v239, %v247
      %v250 = vpack.c.bf16 %v249, %v248
      %251 = vrot.lane.b32.xlu0 %v130, 56
      %v252 = vpop.permute.xlu0 %251
      %v255 = vsel %vm157, %v250, 0
      %257 = vmatpush.bf16.msra.mxu0 0
      %258 = vmatpush.bf16.msra.mxu0 0
      %259 = vmatpush.bf16.msra.mxu0 0
      %260 = vmatpush.bf16.msra.mxu0 0
      %261 = vmatpush.bf16.msra.mxu0 0
      %262 = vmatpush.bf16.msra.mxu0 0
      %263 = vmatpush.bf16.msra.mxu0 0
      %264 = vmatpush.bf16.msra.mxu0 %v252
      %265 = vmatmul.bf16.gmra.mxu0 %v255
      %v266 = vpop.f32.mrf.mxu0
      %v267 = vadd.f32 0.0, %v266
      %v268 = vpop.f32.mrf.mxu0
      %v269 = vadd.f32 0.0, %v268
      %270 = vdwg.mxu0
      %271 = vrot.lane.b32.xlu0 %v129, 112
      %v272 = vpop.permute.xlu0 %271
      %273 = vrot.lane.b32.xlu0 %v130, 80
      %v274 = vpop.permute.xlu0 %273
      %v276 = vsel %vm134, %v272, 0
      %v279 = vsel %vm134, %v274, 0
      %281 = vmatpush.bf16.xpose.msra.mxu0 0
      %282 = vmatpush.bf16.xpose.msra.mxu0 0
      %283 = vmatpush.bf16.xpose.msra.mxu0 0
      %284 = vmatpush.bf16.xpose.msra.mxu0 0
      %285 = vmatpush.bf16.xpose.msra.mxu0 0
      %286 = vmatpush.bf16.xpose.msra.mxu0 0
      %287 = vmatpush.bf16.xpose.msra.mxu0 0
      %288 = vmatpush.bf16.xpose.msra.mxu0 %v279
      %289 = vmatmul.bf16.gmra.mxu0 %v276
      %v290 = vpop.f32.mrf.mxu0
      %v291 = vadd.f32 0.0, %v290
      %v292 = vpop.f32.mrf.mxu0
      %v293 = vadd.f32 0.0, %v292
      %294 = vdwg.mxu0
      %v295 = vsel %vm125, %v291, -1e+30
      %v296 = vsel %vm126, %v293, -1e+30
      %v297 = vsel %vm157, %v295, -inf
      %298 = vmax.xlane.f32.xlu0 %v297
      %v299 = vpop.xlane.xlu0 %298
      %v300 = vsel %vm157, %v296, -inf
      %301 = vmax.xlane.f32.xlu0 %v300
      %v302 = vpop.xlane.xlu0 %301
      %v303 = vsub.f32 %v295, %v299
      %v304 = vsub.f32 %v296, %v302
      %v305 = vmul.f32 %v303, 1.442695
      %v306 = vpow.pop %v305
      %v307 = vmul.f32 %v304, 1.442695
      %v308 = vpow.pop %v307
      %v309 = vsel %vm157, %v306, 0.0
      %310 = vadd.xlane.f32.xlu0 %v309
      %v311 = vpop.xlane.xlu0 %310
      %v312 = vsel %vm157, %v308, 0.0
      %313 = vadd.xlane.f32.xlu0 %v312
      %v314 = vpop.xlane.xlu0 %313
      %v315 = vrcp.pop %v311
      %v316 = vrcp.pop %v314
      %v317 = vmul.f32 %v306, %v315
      %v318 = vmul.f32 %v308, %v316
      %v319 = vpack.c.bf16 %v318, %v317
      %320 = vrot.lane.b32.xlu0 %v130, 48
      %v321 = vpop.permute.xlu0 %320
      %v324 = vsel %vm157, %v319, 0
      %326 = vmatpush.bf16.msra.mxu0 0
      %327 = vmatpush.bf16.msra.mxu0 0
      %328 = vmatpush.bf16.msra.mxu0 0
      %329 = vmatpush.bf16.msra.mxu0 0
      %330 = vmatpush.bf16.msra.mxu0 0
      %331 = vmatpush.bf16.msra.mxu0 0
      %332 = vmatpush.bf16.msra.mxu0 0
      %333 = vmatpush.bf16.msra.mxu0 %v321
      %334 = vmatmul.bf16.gmra.mxu0 %v324
      %v335 = vpop.f32.mrf.mxu0
      %v336 = vadd.f32 0.0, %v335
      %v337 = vpop.f32.mrf.mxu0
      %v338 = vadd.f32 0.0, %v337
      %339 = vdwg.mxu0
      %340 = vrot.lane.b32.xlu0 %v129, 104
      %v341 = vpop.permute.xlu0 %340
      %342 = vrot.lane.b32.xlu0 %v130, 72
      %v343 = vpop.permute.xlu0 %342
      %v345 = vsel %vm134, %v341, 0
      %v348 = vsel %vm134, %v343, 0
      %350 = vmatpush.bf16.xpose.msra.mxu0 0
      %351 = vmatpush.bf16.xpose.msra.mxu0 0
      %352 = vmatpush.bf16.xpose.msra.mxu0 0
      %353 = vmatpush.bf16.xpose.msra.mxu0 0
      %354 = vmatpush.bf16.xpose.msra.mxu0 0
      %355 = vmatpush.bf16.xpose.msra.mxu0 0
      %356 = vmatpush.bf16.xpose.msra.mxu0 0
      %357 = vmatpush.bf16.xpose.msra.mxu0 %v348
      %358 = vmatmul.bf16.gmra.mxu0 %v345
      %v359 = vpop.f32.mrf.mxu0
      %v360 = vadd.f32 0.0, %v359
      %v361 = vpop.f32.mrf.mxu0
      %v362 = vadd.f32 0.0, %v361
      %363 = vdwg.mxu0
      %v364 = vsel %vm125, %v360, -1e+30
      %v365 = vsel %vm126, %v362, -1e+30
      %v366 = vsel %vm157, %v364, -inf
      %367 = vmax.xlane.f32.xlu0 %v366
      %v368 = vpop.xlane.xlu0 %367
      %v369 = vsel %vm157, %v365, -inf
      %370 = vmax.xlane.f32.xlu0 %v369
      %v371 = vpop.xlane.xlu0 %370
      %v372 = vsub.f32 %v364, %v368
      %v373 = vsub.f32 %v365, %v371
      %v374 = vmul.f32 %v372, 1.442695
      %v375 = vpow.pop %v374
      %v376 = vmul.f32 %v373, 1.442695
      %v377 = vpow.pop %v376
      %v378 = vsel %vm157, %v375, 0.0
      %379 = vadd.xlane.f32.xlu0 %v378
      %v380 = vpop.xlane.xlu0 %379
      %v381 = vsel %vm157, %v377, 0.0
      %382 = vadd.xlane.f32.xlu0 %v381
      %v383 = vpop.xlane.xlu0 %382
      %v384 = vrcp.pop %v380
      %v385 = vrcp.pop %v383
      %v386 = vmul.f32 %v375, %v384
      %v387 = vmul.f32 %v377, %v385
      %v388 = vpack.c.bf16 %v387, %v386
      %389 = vrot.lane.b32.xlu0 %v130, 40
      %v390 = vpop.permute.xlu0 %389
      %v393 = vsel %vm157, %v388, 0
      %395 = vmatpush.bf16.msra.mxu0 0
      %396 = vmatpush.bf16.msra.mxu0 0
      %397 = vmatpush.bf16.msra.mxu0 0
      %398 = vmatpush.bf16.msra.mxu0 0
      %399 = vmatpush.bf16.msra.mxu0 0
      %400 = vmatpush.bf16.msra.mxu0 0
      %401 = vmatpush.bf16.msra.mxu0 0
      %402 = vmatpush.bf16.msra.mxu0 %v390
      %403 = vmatmul.bf16.gmra.mxu0 %v393
      %v404 = vpop.f32.mrf.mxu0
      %v405 = vadd.f32 0.0, %v404
      %v406 = vpop.f32.mrf.mxu0
      %v407 = vadd.f32 0.0, %v406
      %408 = vdwg.mxu0
      %411 = vrot.lane.b32.xlu0 %v267, 8
      %v412 = vpop.permute.xlu0 %411
      %413 = vrot.lane.b32.xlu0 %v269, 8
      %v414 = vpop.permute.xlu0 %413
      %419 = vrot.lane.b32.xlu0 %v336, 16
      %v420 = vpop.permute.xlu0 %419
      %421 = vrot.lane.b32.xlu0 %v338, 16
      %v422 = vpop.permute.xlu0 %421
      %427 = vrot.lane.b32.xlu0 %v405, 24
      %v428 = vpop.permute.xlu0 %427
      %429 = vrot.lane.b32.xlu0 %v407, 24
      %v430 = vpop.permute.xlu0 %429
      %v433 = vsel %vm134, %v197, %v412
      %v434 = vsel %vm134, %v199, %v414
      %v435 = vsel %vm157, %v433, %v420
      %v436 = vsel %vm157, %v434, %v422
      %vm437 = vcmask 195584
      %v438 = vsel %vm437, %v435, %v428
      %v439 = vsel %vm437, %v436, %v430
      %vm440 = vcmask 261120
      %441 = vst.msk [vmem:[%s116] sm:$0xff] %vm440, %v438
      %442 = vst.msk [vmem:[%s116 + $0x8] sm:$0xff] %vm440, %v439
      %p443 = scmp.lt.s32.totalorder %s12, 1
      %s444 = scalar_select %p443, %s12, 1
      %s445 = smul.addr %s444, 2
      %s446 = smul.addr %s445, 8
      %s447 = scalar_lea.vmem %s1, %s446
      // Predicated region
      $region25: #{_lambda_.12} parent=23 // pred_check
        %p448 = pneg %p56
      $region26: #{_lambda_.12} parent=23 // pred_check_branch
        %450 = sbr.rel (%p448) target = $region28
      $region27: #{_lambda_.12} parent=23 // pred_region
        _
      $region28: #{_lambda_.12} parent=23 // pred_fallthru
        _
    $region24: #{_lambda_.12} parent=5 // pred_fallthru
      _
    %p451 = scmp.le.s32.totalorder 2, %s7
    // Predicated region
    $region29: #{_lambda_.12} parent=5 // pred_check
      %p452 = pneg %p451
    $region30: #{_lambda_.12} parent=5 // pred_check_branch
      %454 = sbr.rel (%p452) target = $region32
    $region31: #{_lambda_.12} parent=5 // pred_region
      %s455 = ssub.s32 %s7, 2
      // Predicated region
      $region33: #{_lambda_.12} parent=31 // pred_check
        %p456 = pneg %p62
      $region34: #{_lambda_.12} parent=31 // pred_check_branch
        %458 = sbr.rel (%p456) target = $region36
      $region35: #{_lambda_.12} parent=31 // pred_region
        %p459 = scmp.lt.s32.totalorder %s13, 1
        %s460 = scalar_select %p459, %s13, 1
        %s461 = smul.addr %s460, 2
        %s462 = smul.addr %s461, 8
        %s463 = scalar_lea.vmem %s1, %s462
      $region36: #{_lambda_.12} parent=31 // pred_fallthru
        _
    $region32: #{_lambda_.12} parent=5 // pred_fallthru
      _
  $region6: #{_lambda_.12} parent=0 // loop_footer
    %s11 = sadd.s32 1, %s7
  $region7: #{_lambda_.12} parent=0 // loop_footer_branch
    %6 = sbr.rel target = $region3
  $region8: #{_lambda_.12} parent=0 // loop_exit
    _

// kernel: _lambda_.14
$region0: #{_lambda_.14}
  #allocation0 [shape = 'u32[]', space=smem, size = 0x4, offset = 0x4, fixed_abs, tag = 'smem constant byte address 0x4 - core index']
  #allocation1 [shape = 'u32[72,128]{1,0:T(1,128)}', space=vmem, size = 0x9000, scoped, tag = 'internal scratch']
  %s0 = inlined_call_operand.vmem [shape: f32[32,32], index: 0, kind: input, shape index: {}]
  %s1 = inlined_call_operand.vmem [shape: f32[32,64], index: 1, kind: input, shape index: {}]
  %s2 = inlined_call_operand.vmem [shape: f32[1,64], index: 2, kind: input, shape index: {}]
  %s3 = inlined_call_operand.vmem [shape: f32[64,32], index: 3, kind: input, shape index: {}]
  %s4 = inlined_call_operand.vmem [shape: f32[1,32], index: 4, kind: input, shape index: {}]
  %s5 = inlined_call_operand.vmem [shape: f32[1,32], index: 5, kind: input, shape index: {}]
  %s6 = inlined_call_operand.vmem [shape: f32[1,32], index: 6, kind: input, shape index: {}]
  %s7 = inlined_call_operand.vmem [shape: f32[32,32], index: 7, kind: output, shape index: {}]
  %s8 = sld [smem:[#allocation0]]
  $region38: #{_lambda_.14} parent=0
    _
  %s10 = ssub.s32 1, %s8
  %s11 = scalar_select 0, %s10, %s8
  // Predicated region
  $region2: #{_lambda_.14} parent=0 // pred_check
    _
  $region3: #{_lambda_.14} parent=0 // pred_check_branch
    %13 = sbr.rel (0) target = $region5
  $region4: #{_lambda_.14} parent=0 // pred_region
    _
  $region5: #{_lambda_.14} parent=0 // pred_fallthru
    _
  // Predicated region
  $region6: #{_lambda_.14} parent=0 // pred_check
    _
  $region7: #{_lambda_.14} parent=0 // pred_check_branch
    %15 = sbr.rel (0) target = $region9
  $region8: #{_lambda_.14} parent=0 // pred_region
    _
  $region9: #{_lambda_.14} parent=0 // pred_fallthru
    _
  // Predicated region
  $region10: #{_lambda_.14} parent=0 // pred_check
    _
  $region11: #{_lambda_.14} parent=0 // pred_check_branch
    %17 = sbr.rel (0) target = $region13
  $region12: #{_lambda_.14} parent=0 // pred_region
    _
  $region13: #{_lambda_.14} parent=0 // pred_fallthru
    _
  // Predicated region
  $region14: #{_lambda_.14} parent=0 // pred_check
    _
  $region15: #{_lambda_.14} parent=0 // pred_check_branch
    %19 = sbr.rel (0) target = $region17
  $region16: #{_lambda_.14} parent=0 // pred_region
    _
  $region17: #{_lambda_.14} parent=0 // pred_fallthru
    _
  // Predicated region
  $region18: #{_lambda_.14} parent=0 // pred_check
    _
  $region19: #{_lambda_.14} parent=0 // pred_check_branch
    %21 = sbr.rel (0) target = $region21
  $region20: #{_lambda_.14} parent=0 // pred_region
    _
  $region21: #{_lambda_.14} parent=0 // pred_fallthru
    _
  // Predicated region
  $region22: #{_lambda_.14} parent=0 // pred_check
    _
  $region23: #{_lambda_.14} parent=0 // pred_check_branch
    %23 = sbr.rel (0) target = $region25
  $region24: #{_lambda_.14} parent=0 // pred_region
    _
  $region25: #{_lambda_.14} parent=0 // pred_fallthru
    _
  // Predicated region
  $region26: #{_lambda_.14} parent=0 // pred_check
    _
  $region27: #{_lambda_.14} parent=0 // pred_check_branch
    %25 = sbr.rel (0) target = $region29
  $region28: #{_lambda_.14} parent=0 // pred_region
    _
  $region29: #{_lambda_.14} parent=0 // pred_fallthru
    _
  %v27 = vld [vmem:[%s0] sm:$0xff]
  %v28 = vld [vmem:[%s0 + $0x8] sm:$0xff]
  %v29 = vld [vmem:[%s0 + $0x10] sm:$0xff]
  %v30 = vld [vmem:[%s0 + $0x18] sm:$0xff]
  %v31 = vpack.c.bf16 %v28, %v27
  %v32 = vpack.c.bf16 %v30, %v29
  %v33 = vld [vmem:[%s1] sm:$0xff]
  %v34 = vld [vmem:[%s1 + $0x8] sm:$0xff]
  %v35 = vld [vmem:[%s1 + $0x10] sm:$0xff]
  %v36 = vld [vmem:[%s1 + $0x18] sm:$0xff]
  %v37 = vpack.c.bf16 %v34, %v33
  %v38 = vpack.c.bf16 %v36, %v35
  %v39 = vld [vmem:[%s2] sm:$0x1]
  %v41 = vperm.slane %v39, 0
  %vm43 = vcmask 261120
  %v45 = vsel %vm43, %v31, 0
  %v48 = vsel %vm43, %v32, 0
  %50 = vmatpush.bf16.msra.mxu0 0
  %51 = vmatpush.bf16.msra.mxu0 0
  %52 = vmatpush.bf16.msra.mxu0 0
  %53 = vmatpush.bf16.msra.mxu0 0
  %54 = vmatpush.bf16.msra.mxu0 0
  %55 = vmatpush.bf16.msra.mxu0 0
  %56 = vmatpush.bf16.msra.mxu0 %v38
  %57 = vmatpush.bf16.msra.mxu0 %v37
  %58 = vmatmul.bf16.gmra.mxu0 %v45
  %v59 = vpop.f32.mrf.mxu0
  %v60 = vadd.f32 %v41, %v59
  %v61 = vpop.f32.mrf.mxu0
  %v62 = vadd.f32 %v41, %v61
  %63 = vmatmul.bf16.gmra.mxu0 %v48
  %v64 = vpop.f32.mrf.mxu0
  %v65 = vadd.f32 %v41, %v64
  %v66 = vpop.f32.mrf.mxu0
  %v67 = vadd.f32 %v41, %v66
  %68 = vdwg.mxu0
  %v69 = vmax.f32 %v60, 0.0
  %v70 = vmax.f32 %v62, 0.0
  %v71 = vmax.f32 %v65, 0.0
  %v72 = vmax.f32 %v67, 0.0
  %v73 = vpack.c.bf16 %v70, %v69
  %v74 = vpack.c.bf16 %v72, %v71
  %v75 = vld [vmem:[%s3] sm:$0xff]
  %v76 = vld [vmem:[%s3 + $0x8] sm:$0xff]
  %v77 = vld [vmem:[%s3 + $0x10] sm:$0xff]
  %v78 = vld [vmem:[%s3 + $0x18] sm:$0xff]
  %v79 = vld [vmem:[%s3 + $0x20] sm:$0xff]
  %v80 = vld [vmem:[%s3 + $0x28] sm:$0xff]
  %v81 = vld [vmem:[%s3 + $0x30] sm:$0xff]
  %v82 = vld [vmem:[%s3 + $0x38] sm:$0xff]
  %v83 = vpack.c.bf16 %v76, %v75
  %v84 = vpack.c.bf16 %v78, %v77
  %v85 = vpack.c.bf16 %v80, %v79
  %v86 = vpack.c.bf16 %v82, %v81
  %v87 = vld [vmem:[%s4] sm:$0x1]
  %v89 = vperm.slane %v87, 0
  %vm91 = vcmask 523264
  %v93 = vsel %vm91, %v73, 0
  %v96 = vsel %vm91, %v74, 0
  %98 = vmatpush.bf16.msra.mxu0 0
  %99 = vmatpush.bf16.msra.mxu0 0
  %100 = vmatpush.bf16.msra.mxu0 0
  %101 = vmatpush.bf16.msra.mxu0 0
  %102 = vmatpush.bf16.msra.mxu0 %v86
  %103 = vmatpush.bf16.msra.mxu0 %v85
  %104 = vmatpush.bf16.msra.mxu0 %v84
  %105 = vmatpush.bf16.msra.mxu0 %v83
  %106 = vmatmul.bf16.gmra.mxu0 %v93
  %v107 = vpop.f32.mrf.mxu0
  %v108 = vadd.f32 %v89, %v107
  %v109 = vpop.f32.mrf.mxu0
  %v110 = vadd.f32 %v89, %v109
  %111 = vmatmul.bf16.gmra.mxu0 %v96
  %v112 = vpop.f32.mrf.mxu0
  %v113 = vadd.f32 %v89, %v112
  %v114 = vpop.f32.mrf.mxu0
  %v115 = vadd.f32 %v89, %v114
  %116 = vdwg.mxu0
  %v117 = vadd.f32 %v27, %v108
  %v118 = vadd.f32 %v28, %v110
  %v119 = vadd.f32 %v29, %v113
  %v120 = vadd.f32 %v30, %v115
  %v121 = vld [vmem:[%s5] sm:$0x1]
  %v122 = vld [vmem:[%s6] sm:$0x1]
  %v123 = vsel %vm43, %v117, 0.0
  %124 = vadd.xlane.f32.xlu0 %v123
  %v125 = vpop.xlane.xlu0 %124
  %v126 = vsel %vm43, %v118, 0.0
  %127 = vadd.xlane.f32.xlu0 %v126
  %v128 = vpop.xlane.xlu0 %127
  %v129 = vsel %vm43, %v119, 0.0
  %130 = vadd.xlane.f32.xlu0 %v129
  %v131 = vpop.xlane.xlu0 %130
  %v132 = vsel %vm43, %v120, 0.0
  %133 = vadd.xlane.f32.xlu0 %v132
  %v134 = vpop.xlane.xlu0 %133
  %v135 = vrcp.pop 32.0
  %v136 = vmul.f32 32.0, %v135
  %v137 = vsub.f32 1.0, %v136
  %v138 = vmul.f32 %v135, %v137
  %v139 = vadd.f32 %v135, %v138
  %vm140 = vweird.f32 %v135
  %v141 = vsel %vm140, %v135, %v139
  %v142 = vmul.f32 %v125, %v141
  %v143 = vmul.f32 %v128, %v141
  %v144 = vmul.f32 %v131, %v141
  %v145 = vmul.f32 %v134, %v141
  %v146 = vsub.f32 %v117, %v142
  %v147 = vsub.f32 %v118, %v143
  %v148 = vsub.f32 %v119, %v144
  %v149 = vsub.f32 %v120, %v145
  %v150 = vmul.f32 %v146, %v146
  %v151 = vmul.f32 %v147, %v147
  %v152 = vmul.f32 %v148, %v148
  %v153 = vmul.f32 %v149, %v149
  %v154 = vsel %vm43, %v150, 0.0
  %155 = vadd.xlane.f32.xlu0 %v154
  %v156 = vpop.xlane.xlu0 %155
  %v157 = vsel %vm43, %v151, 0.0
  %158 = vadd.xlane.f32.xlu0 %v157
  %v159 = vpop.xlane.xlu0 %158
  %v160 = vsel %vm43, %v152, 0.0
  %161 = vadd.xlane.f32.xlu0 %v160
  %v162 = vpop.xlane.xlu0 %161
  %v163 = vsel %vm43, %v153, 0.0
  %164 = vadd.xlane.f32.xlu0 %v163
  %v165 = vpop.xlane.xlu0 %164
  %v166 = vmul.f32 %v156, %v141
  %v167 = vmul.f32 %v159, %v141
  %v168 = vmul.f32 %v162, %v141
  %v169 = vmul.f32 %v165, %v141
  %v170 = vadd.f32 %v166, 1e-05
  %v171 = vadd.f32 %v167, 1e-05
  %v172 = vadd.f32 %v168, 1e-05
  %v173 = vadd.f32 %v169, 1e-05
  %v174 = vrsqrt.pop %v170
  %v175 = vmul.f32 %v174, %v170
  %v176 = vmul.f32 %v175, %v174
  %v177 = vmul.f32 0.5, %v176
  %v178 = vsub.f32 1.5, %v177
  %v179 = vmul.f32 %v174, %v178
  %vm180 = vweird.f32 %v170
  %vm181 = vweird.f32 %v174
  %vm182 = vmor %vm180, %vm181
  %v183 = vsel %vm182, %v174, %v179
  %v184 = vrsqrt.pop %v171
  %v185 = vmul.f32 %v184, %v171
  %v186 = vmul.f32 %v185, %v184
  %v187 = vmul.f32 0.5, %v186
  %v188 = vsub.f32 1.5, %v187
  %v189 = vmul.f32 %v184, %v188
  %vm190 = vweird.f32 %v171
  %vm191 = vweird.f32 %v184
  %vm192 = vmor %vm190, %vm191
  %v193 = vsel %vm192, %v184, %v189
  %v194 = vrsqrt.pop %v172
  %v195 = vmul.f32 %v194, %v172
  %v196 = vmul.f32 %v195, %v194
  %v197 = vmul.f32 0.5, %v196
  %v198 = vsub.f32 1.5, %v197
  %v199 = vmul.f32 %v194, %v198
  %vm200 = vweird.f32 %v172
  %vm201 = vweird.f32 %v194
  %vm202 = vmor %vm200, %vm201
  %v203 = vsel %vm202, %v194, %v199
  %v204 = vrsqrt.pop %v173
  %v205 = vmul.f32 %v204, %v173
  %v206 = vmul.f32 %v205, %v204
  %v207 = vmul.f32 0.5, %v206
  %v208 = vsub.f32 1.5, %v207
  %v209 = vmul.f32 %v204, %v208
  %vm210 = vweird.f32 %v173
  %vm211 = vweird.f32 %v204
  %vm212 = vmor %vm210, %vm211
  %v213 = vsel %vm212, %v204, %v209
  %v214 = vmul.f32 %v146, %v183
  %v215 = vmul.f32 %v147, %v193
  %v216 = vmul.f32 %v148, %v203
  %v217 = vmul.f32 %v149, %v213
  %v219 = vperm.slane %v121, 0
  %v221 = vmul.f32 %v214, %v219
  %v222 = vmul.f32 %v215, %v219
  %v223 = vmul.f32 %v216, %v219
  %v224 = vmul.f32 %v217, %v219
  %v226 = vperm.slane %v122, 0
  %v228 = vadd.f32 %v221, %v226
  %v229 = vadd.f32 %v222, %v226
  %v230 = vadd.f32 %v223, %v226
  %v231 = vadd.f32 %v224, %v226
  %232 = vst.msk [vmem:[%s7] sm:$0xff] %vm43, %v228
  %233 = vst.msk [vmem:[%s7 + $0x8] sm:$0xff] %vm43, %v229
  %234 = vst.msk [vmem:[%s7 + $0x10] sm:$0xff] %vm43, %v230
  %235 = vst.msk [vmem:[%s7 + $0x18] sm:$0xff] %vm43, %v231
  // Predicated region
  $region30: #{_lambda_.14} parent=0 // pred_check
    _
  $region31: #{_lambda_.14} parent=0 // pred_check_branch
    %237 = sbr.rel (0) target = $region33
  $region32: #{_lambda_.14} parent=0 // pred_region
    _
  $region33: #{_lambda_.14} parent=0 // pred_fallthru
    _
  // Predicated region
  $region34: #{_lambda_.14} parent=0 // pred_check
    _
  $region35: #{_lambda_.14} parent=0 // pred_check_branch
    %239 = sbr.rel (0) target = $region37
  $region36: #{_lambda_.14} parent=0 // pred_region
    _
  $region37: #{_lambda_.14} parent=0 // pred_fallthru
    _

</llo_original>
